<compile_context>
chip_gen: v7x
topology: tpu7x:2x2x1
jax: 0.10.0
libtpu: 0.0.40
codegen_flags: <defaults>
</compile_context>

<pallas_src>
import functools

import jax
import jax.numpy as jnp
from jax import lax
from jax.experimental import pallas as pl
from jax.experimental.pallas import tpu as pltpu


def _sosr_kernel(aa_ref, pp_ref, out_ref, *, knn):
    # aa_ref / pp_ref: (bs, TILE_N) column tile of the full (bs, bs) matrices.
    aa = aa_ref[...].astype(jnp.float32)
    pp = pp_ref[...].astype(jnp.float32)
    bs = aa.shape[0]

    if knn != 0:
        row_ids = lax.broadcasted_iota(jnp.int32, aa.shape, 0)
        neg_big = jnp.float32(-3.0e38)

        # One fused, fully-unrolled loop selecting the column-wise top-knn rows of
        # both AA and PP (tie-break: smallest row index, matching the reference).
        def body(_, carry):
            xa, xp, hit = carry
            amax = jnp.max(xa, axis=0, keepdims=True)                      # (1, tn)
            pmax = jnp.max(xp, axis=0, keepdims=True)                      # (1, tn)
            a_arg = jnp.min(jnp.where(xa >= amax, row_ids, bs), axis=0,
                            keepdims=True)                                 # (1, tn)
            p_arg = jnp.min(jnp.where(xp >= pmax, row_ids, bs), axis=0,
                            keepdims=True)                                 # (1, tn)
            a_sel = row_ids == a_arg
            p_sel = row_ids == p_arg
            hit = hit | a_sel | p_sel
            xa = jnp.where(a_sel, neg_big, xa)
            xp = jnp.where(p_sel, neg_big, xp)
            return xa, xp, hit

        hit0 = jnp.zeros(aa.shape, dtype=jnp.bool_)
        _, _, hit = lax.fori_loop(0, knn, body, (aa, pp, hit0), unroll=True)

        # Compute AAPP after the hot loop and fuse the {1, 1e-8} mask into the sum
        # to keep live (bs, TILE_N) buffers to a minimum.
        aapp = (aa - pp + jnp.float32(1e-8)) ** 2
        weighted = jnp.where(hit, aapp, aapp * jnp.float32(1e-8))
        temp1 = jnp.sum(weighted, axis=0, keepdims=True)                   # (1, tn)
    else:
        aapp = (aa - pp + jnp.float32(1e-8)) ** 2
        temp1 = jnp.sum(aapp, axis=0, keepdims=True)                       # (1, tn)

    out_ref[...] = jnp.sqrt(temp1 + jnp.float32(1e-8))                     # (1, tn)


def _pick_tile_n(bs):
    """Largest column tile (multiple of 128) keeping ~12 live (bs, tile) f32
    buffers under ~24 MiB, so it fits scoped VMEM on v5e/v6e/v7x."""
    if bs % 128 != 0:
        return bs  # non-tileable width: fall back to a full block
    budget_bytes = 24 * 1024 * 1024
    for t in (512, 256, 128):
        if bs % t == 0 and 12 * bs * t * 4 <= budget_bytes:
            return t
    return 128


def sosr_pallas(aa, pp, *, knn=8, tile_n=None):
    bs = aa.shape[0]
    assert aa.shape == (bs, bs) and pp.shape == (bs, bs)
    if tile_n is None:
        tile_n = _pick_tile_n(bs)
    assert bs % tile_n == 0
    num_tiles = bs // tile_n

    kernel = functools.partial(_sosr_kernel, knn=knn)
    sos = pl.pallas_call(
        kernel,
        out_shape=jax.ShapeDtypeStruct((1, bs), jnp.float32),
        grid=(num_tiles,),
        in_specs=[
            pl.BlockSpec((bs, tile_n), lambda j: (0, j)),
            pl.BlockSpec((bs, tile_n), lambda j: (0, j)),
        ],
        out_specs=pl.BlockSpec((1, tile_n), lambda j: (0, j)),
        compiler_params=pltpu.CompilerParams(
            dimension_semantics=("parallel",),      # column tiles are independent
            vmem_limit_bytes=32 * 1024 * 1024,      # explicit, consistent across gens
        ),
    )(aa, pp)
    # Lane-dense per-column sqrt values come back; finish the mean in plain JAX.
    return jnp.mean(sos)


def sosr_reference(aa, pp, knn=8):
    """Pure-JAX reference mirroring the PyTorch forward (dense path)."""
    bs = aa.shape[0]
    aapp = (aa - pp + 1e-8) ** 2
    if knn != 0:
        cols = jnp.arange(bs)[None, :]
        _, idx_aa = lax.top_k(aa.T, knn)   # (bs, knn): top-k per column of aa
        _, idx_pp = lax.top_k(pp.T, knn)
        mask = jnp.full((bs, bs), 1e-8, dtype=jnp.float32)
        mask = mask.at[idx_aa.T, cols].set(1.0)
        mask = mask.at[idx_pp.T, cols].set(1.0)
        temp1 = jnp.sum(aapp * mask, axis=0)
    else:
        temp1 = jnp.sum(aapp, axis=0)
    return jnp.mean(jnp.sqrt(temp1 + 1e-8))


if __name__ == "__main__":
    bs, knn = 128, 8   # module defaults knn=8; small bs instead of 1024

    key = jax.random.PRNGKey(0)
    k1, k2 = jax.random.split(key)
    # Synthetic "distance matrices" (the module consumes precomputed distance matrices).
    AA_DisMat = jax.random.uniform(k1, (bs, bs), jnp.float32, 0.0, 2.0)
    PP_DisMat = jax.random.uniform(k2, (bs, bs), jnp.float32, 0.0, 2.0)

    out = sosr_pallas(AA_DisMat, PP_DisMat, knn=knn)
    jax.block_until_ready(out)

    ref = sosr_reference(AA_DisMat, PP_DisMat, knn=knn)
    assert jnp.allclose(out, ref, rtol=1e-5, atol=1e-6), (float(out), float(ref))

    # Also exercise the knn=0 path once (cheap, same shapes).
    out0 = sosr_pallas(AA_DisMat, PP_DisMat, knn=0)
    ref0 = sosr_reference(AA_DisMat, PP_DisMat, knn=0)
    jax.block_until_ready(out0)
    assert jnp.allclose(out0, ref0, rtol=1e-5, atol=1e-6), (float(out0), float(ref0))

    print("KERNEL_OK")
</pallas_src>

<mosaic_0001>
module attributes {stable_mosaic.version = 11 : i64} {
  func.func @_sosr_kernel(%arg0: i32, %arg1: memref<128x128xf32, #tpu.memory_space<vmem>>, %arg2: memref<128x128xf32, #tpu.memory_space<vmem>>, %arg3: memref<1x128xf32, #tpu.memory_space<vmem>>) attributes {dimension_semantics = [#tpu.dimension_semantics<parallel>], iteration_bounds = array<i64: 1>, scalar_prefetch = 0 : i64, scratch_operands = 0 : i64, tpu.core_type = #tpu.core_type<tc>, window_params = [{transform_indices = @transform_0, window_bounds = array<i64: 128, 128>}, {transform_indices = @transform_1, window_bounds = array<i64: 128, 128>}, {transform_indices = @transform_2, window_bounds = array<i64: 1, 128>}]} {
    %c0 = arith.constant 0 : index
    %c0_0 = arith.constant 0 : index
    %0 = vector.load %arg1[%c0, %c0_0] : memref<128x128xf32, #tpu.memory_space<vmem>>, vector<128x128xf32>
    %c0_1 = arith.constant 0 : index
    %c0_2 = arith.constant 0 : index
    %1 = vector.load %arg2[%c0_1, %c0_2] : memref<128x128xf32, #tpu.memory_space<vmem>>, vector<128x128xf32>
    %2 = tpu.iota {dimensions = array<i32: 0>} : vector<128x128xi32>
    %false = arith.constant false
    %3 = vector.broadcast %false : i1 to vector<128x128xi1>
    %cst = arith.constant -3.000000e+38 : f32
    %c0_i32 = arith.constant 0 : i32
    %cst_3 = arith.constant dense<0xFF800000> : vector<128xf32>
    %4 = vector.multi_reduction <maximumf>, %0, %cst_3 [0] : vector<128x128xf32> to vector<128xf32>
    %5 = vector.shape_cast %4 : vector<128xf32> to vector<1x128xf32>
    %cst_4 = arith.constant dense<0xFF800000> : vector<128xf32>
    %6 = vector.multi_reduction <maximumf>, %1, %cst_4 [0] : vector<128x128xf32> to vector<128xf32>
    %7 = vector.shape_cast %6 : vector<128xf32> to vector<1x128xf32>
    %8 = vector.broadcast %5 : vector<1x128xf32> to vector<128x128xf32>
    %9 = arith.cmpf oge, %0, %8 : vector<128x128xf32>
    %c128_i32 = arith.constant 128 : i32
    %10 = vector.broadcast %c128_i32 : i32 to vector<128x128xi32>
    %11 = arith.select %9, %2, %10 : vector<128x128xi1>, vector<128x128xi32>
    %cst_5 = arith.constant dense<2147483647> : vector<128xi32>
    %12 = vector.multi_reduction <minsi>, %11, %cst_5 [0] : vector<128x128xi32> to vector<128xi32>
    %13 = vector.shape_cast %12 : vector<128xi32> to vector<1x128xi32>
    %14 = vector.broadcast %7 : vector<1x128xf32> to vector<128x128xf32>
    %15 = arith.cmpf oge, %1, %14 : vector<128x128xf32>
    %c128_i32_6 = arith.constant 128 : i32
    %16 = vector.broadcast %c128_i32_6 : i32 to vector<128x128xi32>
    %17 = arith.select %15, %2, %16 : vector<128x128xi1>, vector<128x128xi32>
    %cst_7 = arith.constant dense<2147483647> : vector<128xi32>
    %18 = vector.multi_reduction <minsi>, %17, %cst_7 [0] : vector<128x128xi32> to vector<128xi32>
    %19 = vector.shape_cast %18 : vector<128xi32> to vector<1x128xi32>
    %20 = vector.broadcast %13 : vector<1x128xi32> to vector<128x128xi32>
    %21 = arith.cmpi eq, %2, %20 : vector<128x128xi32>
    %22 = vector.broadcast %19 : vector<1x128xi32> to vector<128x128xi32>
    %23 = arith.cmpi eq, %2, %22 : vector<128x128xi32>
    %24 = arith.ori %3, %21 : vector<128x128xi1>
    %25 = arith.ori %24, %23 : vector<128x128xi1>
    %26 = vector.broadcast %cst : f32 to vector<128x128xf32>
    %27 = arith.select %21, %26, %0 : vector<128x128xi1>, vector<128x128xf32>
    %28 = vector.broadcast %cst : f32 to vector<128x128xf32>
    %29 = arith.select %23, %28, %1 : vector<128x128xi1>, vector<128x128xf32>
    %c1_i32 = arith.constant 1 : i32
    %cst_8 = arith.constant dense<0xFF800000> : vector<128xf32>
    %30 = vector.multi_reduction <maximumf>, %27, %cst_8 [0] : vector<128x128xf32> to vector<128xf32>
    %31 = vector.shape_cast %30 : vector<128xf32> to vector<1x128xf32>
    %cst_9 = arith.constant dense<0xFF800000> : vector<128xf32>
    %32 = vector.multi_reduction <maximumf>, %29, %cst_9 [0] : vector<128x128xf32> to vector<128xf32>
    %33 = vector.shape_cast %32 : vector<128xf32> to vector<1x128xf32>
    %34 = vector.broadcast %31 : vector<1x128xf32> to vector<128x128xf32>
    %35 = arith.cmpf oge, %27, %34 : vector<128x128xf32>
    %c128_i32_10 = arith.constant 128 : i32
    %36 = vector.broadcast %c128_i32_10 : i32 to vector<128x128xi32>
    %37 = arith.select %35, %2, %36 : vector<128x128xi1>, vector<128x128xi32>
    %cst_11 = arith.constant dense<2147483647> : vector<128xi32>
    %38 = vector.multi_reduction <minsi>, %37, %cst_11 [0] : vector<128x128xi32> to vector<128xi32>
    %39 = vector.shape_cast %38 : vector<128xi32> to vector<1x128xi32>
    %40 = vector.broadcast %33 : vector<1x128xf32> to vector<128x128xf32>
    %41 = arith.cmpf oge, %29, %40 : vector<128x128xf32>
    %c128_i32_12 = arith.constant 128 : i32
    %42 = vector.broadcast %c128_i32_12 : i32 to vector<128x128xi32>
    %43 = arith.select %41, %2, %42 : vector<128x128xi1>, vector<128x128xi32>
    %cst_13 = arith.constant dense<2147483647> : vector<128xi32>
    %44 = vector.multi_reduction <minsi>, %43, %cst_13 [0] : vector<128x128xi32> to vector<128xi32>
    %45 = vector.shape_cast %44 : vector<128xi32> to vector<1x128xi32>
    %46 = vector.broadcast %39 : vector<1x128xi32> to vector<128x128xi32>
    %47 = arith.cmpi eq, %2, %46 : vector<128x128xi32>
    %48 = vector.broadcast %45 : vector<1x128xi32> to vector<128x128xi32>
    %49 = arith.cmpi eq, %2, %48 : vector<128x128xi32>
    %50 = arith.ori %25, %47 : vector<128x128xi1>
    %51 = arith.ori %50, %49 : vector<128x128xi1>
    %52 = vector.broadcast %cst : f32 to vector<128x128xf32>
    %53 = arith.select %47, %52, %27 : vector<128x128xi1>, vector<128x128xf32>
    %54 = vector.broadcast %cst : f32 to vector<128x128xf32>
    %55 = arith.select %49, %54, %29 : vector<128x128xi1>, vector<128x128xf32>
    %c2_i32 = arith.constant 2 : i32
    %cst_14 = arith.constant dense<0xFF800000> : vector<128xf32>
    %56 = vector.multi_reduction <maximumf>, %53, %cst_14 [0] : vector<128x128xf32> to vector<128xf32>
    %57 = vector.shape_cast %56 : vector<128xf32> to vector<1x128xf32>
    %cst_15 = arith.constant dense<0xFF800000> : vector<128xf32>
    %58 = vector.multi_reduction <maximumf>, %55, %cst_15 [0] : vector<128x128xf32> to vector<128xf32>
    %59 = vector.shape_cast %58 : vector<128xf32> to vector<1x128xf32>
    %60 = vector.broadcast %57 : vector<1x128xf32> to vector<128x128xf32>
    %61 = arith.cmpf oge, %53, %60 : vector<128x128xf32>
    %c128_i32_16 = arith.constant 128 : i32
    %62 = vector.broadcast %c128_i32_16 : i32 to vector<128x128xi32>
    %63 = arith.select %61, %2, %62 : vector<128x128xi1>, vector<128x128xi32>
    %cst_17 = arith.constant dense<2147483647> : vector<128xi32>
    %64 = vector.multi_reduction <minsi>, %63, %cst_17 [0] : vector<128x128xi32> to vector<128xi32>
    %65 = vector.shape_cast %64 : vector<128xi32> to vector<1x128xi32>
    %66 = vector.broadcast %59 : vector<1x128xf32> to vector<128x128xf32>
    %67 = arith.cmpf oge, %55, %66 : vector<128x128xf32>
    %c128_i32_18 = arith.constant 128 : i32
    %68 = vector.broadcast %c128_i32_18 : i32 to vector<128x128xi32>
    %69 = arith.select %67, %2, %68 : vector<128x128xi1>, vector<128x128xi32>
    %cst_19 = arith.constant dense<2147483647> : vector<128xi32>
    %70 = vector.multi_reduction <minsi>, %69, %cst_19 [0] : vector<128x128xi32> to vector<128xi32>
    %71 = vector.shape_cast %70 : vector<128xi32> to vector<1x128xi32>
    %72 = vector.broadcast %65 : vector<1x128xi32> to vector<128x128xi32>
    %73 = arith.cmpi eq, %2, %72 : vector<128x128xi32>
    %74 = vector.broadcast %71 : vector<1x128xi32> to vector<128x128xi32>
    %75 = arith.cmpi eq, %2, %74 : vector<128x128xi32>
    %76 = arith.ori %51, %73 : vector<128x128xi1>
    %77 = arith.ori %76, %75 : vector<128x128xi1>
    %78 = vector.broadcast %cst : f32 to vector<128x128xf32>
    %79 = arith.select %73, %78, %53 : vector<128x128xi1>, vector<128x128xf32>
    %80 = vector.broadcast %cst : f32 to vector<128x128xf32>
    %81 = arith.select %75, %80, %55 : vector<128x128xi1>, vector<128x128xf32>
    %c3_i32 = arith.constant 3 : i32
    %cst_20 = arith.constant dense<0xFF800000> : vector<128xf32>
    %82 = vector.multi_reduction <maximumf>, %79, %cst_20 [0] : vector<128x128xf32> to vector<128xf32>
    %83 = vector.shape_cast %82 : vector<128xf32> to vector<1x128xf32>
    %cst_21 = arith.constant dense<0xFF800000> : vector<128xf32>
    %84 = vector.multi_reduction <maximumf>, %81, %cst_21 [0] : vector<128x128xf32> to vector<128xf32>
    %85 = vector.shape_cast %84 : vector<128xf32> to vector<1x128xf32>
    %86 = vector.broadcast %83 : vector<1x128xf32> to vector<128x128xf32>
    %87 = arith.cmpf oge, %79, %86 : vector<128x128xf32>
    %c128_i32_22 = arith.constant 128 : i32
    %88 = vector.broadcast %c128_i32_22 : i32 to vector<128x128xi32>
    %89 = arith.select %87, %2, %88 : vector<128x128xi1>, vector<128x128xi32>
    %cst_23 = arith.constant dense<2147483647> : vector<128xi32>
    %90 = vector.multi_reduction <minsi>, %89, %cst_23 [0] : vector<128x128xi32> to vector<128xi32>
    %91 = vector.shape_cast %90 : vector<128xi32> to vector<1x128xi32>
    %92 = vector.broadcast %85 : vector<1x128xf32> to vector<128x128xf32>
    %93 = arith.cmpf oge, %81, %92 : vector<128x128xf32>
    %c128_i32_24 = arith.constant 128 : i32
    %94 = vector.broadcast %c128_i32_24 : i32 to vector<128x128xi32>
    %95 = arith.select %93, %2, %94 : vector<128x128xi1>, vector<128x128xi32>
    %cst_25 = arith.constant dense<2147483647> : vector<128xi32>
    %96 = vector.multi_reduction <minsi>, %95, %cst_25 [0] : vector<128x128xi32> to vector<128xi32>
    %97 = vector.shape_cast %96 : vector<128xi32> to vector<1x128xi32>
    %98 = vector.broadcast %91 : vector<1x128xi32> to vector<128x128xi32>
    %99 = arith.cmpi eq, %2, %98 : vector<128x128xi32>
    %100 = vector.broadcast %97 : vector<1x128xi32> to vector<128x128xi32>
    %101 = arith.cmpi eq, %2, %100 : vector<128x128xi32>
    %102 = arith.ori %77, %99 : vector<128x128xi1>
    %103 = arith.ori %102, %101 : vector<128x128xi1>
    %104 = vector.broadcast %cst : f32 to vector<128x128xf32>
    %105 = arith.select %99, %104, %79 : vector<128x128xi1>, vector<128x128xf32>
    %106 = vector.broadcast %cst : f32 to vector<128x128xf32>
    %107 = arith.select %101, %106, %81 : vector<128x128xi1>, vector<128x128xf32>
    %c4_i32 = arith.constant 4 : i32
    %cst_26 = arith.constant dense<0xFF800000> : vector<128xf32>
    %108 = vector.multi_reduction <maximumf>, %105, %cst_26 [0] : vector<128x128xf32> to vector<128xf32>
    %109 = vector.shape_cast %108 : vector<128xf32> to vector<1x128xf32>
    %cst_27 = arith.constant dense<0xFF800000> : vector<128xf32>
    %110 = vector.multi_reduction <maximumf>, %107, %cst_27 [0] : vector<128x128xf32> to vector<128xf32>
    %111 = vector.shape_cast %110 : vector<128xf32> to vector<1x128xf32>
    %112 = vector.broadcast %109 : vector<1x128xf32> to vector<128x128xf32>
    %113 = arith.cmpf oge, %105, %112 : vector<128x128xf32>
    %c128_i32_28 = arith.constant 128 : i32
    %114 = vector.broadcast %c128_i32_28 : i32 to vector<128x128xi32>
    %115 = arith.select %113, %2, %114 : vector<128x128xi1>, vector<128x128xi32>
    %cst_29 = arith.constant dense<2147483647> : vector<128xi32>
    %116 = vector.multi_reduction <minsi>, %115, %cst_29 [0] : vector<128x128xi32> to vector<128xi32>
    %117 = vector.shape_cast %116 : vector<128xi32> to vector<1x128xi32>
    %118 = vector.broadcast %111 : vector<1x128xf32> to vector<128x128xf32>
    %119 = arith.cmpf oge, %107, %118 : vector<128x128xf32>
    %c128_i32_30 = arith.constant 128 : i32
    %120 = vector.broadcast %c128_i32_30 : i32 to vector<128x128xi32>
    %121 = arith.select %119, %2, %120 : vector<128x128xi1>, vector<128x128xi32>
    %cst_31 = arith.constant dense<2147483647> : vector<128xi32>
    %122 = vector.multi_reduction <minsi>, %121, %cst_31 [0] : vector<128x128xi32> to vector<128xi32>
    %123 = vector.shape_cast %122 : vector<128xi32> to vector<1x128xi32>
    %124 = vector.broadcast %117 : vector<1x128xi32> to vector<128x128xi32>
    %125 = arith.cmpi eq, %2, %124 : vector<128x128xi32>
    %126 = vector.broadcast %123 : vector<1x128xi32> to vector<128x128xi32>
    %127 = arith.cmpi eq, %2, %126 : vector<128x128xi32>
    %128 = arith.ori %103, %125 : vector<128x128xi1>
    %129 = arith.ori %128, %127 : vector<128x128xi1>
    %130 = vector.broadcast %cst : f32 to vector<128x128xf32>
    %131 = arith.select %125, %130, %105 : vector<128x128xi1>, vector<128x128xf32>
    %132 = vector.broadcast %cst : f32 to vector<128x128xf32>
    %133 = arith.select %127, %132, %107 : vector<128x128xi1>, vector<128x128xf32>
    %c5_i32 = arith.constant 5 : i32
    %cst_32 = arith.constant dense<0xFF800000> : vector<128xf32>
    %134 = vector.multi_reduction <maximumf>, %131, %cst_32 [0] : vector<128x128xf32> to vector<128xf32>
    %135 = vector.shape_cast %134 : vector<128xf32> to vector<1x128xf32>
    %cst_33 = arith.constant dense<0xFF800000> : vector<128xf32>
    %136 = vector.multi_reduction <maximumf>, %133, %cst_33 [0] : vector<128x128xf32> to vector<128xf32>
    %137 = vector.shape_cast %136 : vector<128xf32> to vector<1x128xf32>
    %138 = vector.broadcast %135 : vector<1x128xf32> to vector<128x128xf32>
    %139 = arith.cmpf oge, %131, %138 : vector<128x128xf32>
    %c128_i32_34 = arith.constant 128 : i32
    %140 = vector.broadcast %c128_i32_34 : i32 to vector<128x128xi32>
    %141 = arith.select %139, %2, %140 : vector<128x128xi1>, vector<128x128xi32>
    %cst_35 = arith.constant dense<2147483647> : vector<128xi32>
    %142 = vector.multi_reduction <minsi>, %141, %cst_35 [0] : vector<128x128xi32> to vector<128xi32>
    %143 = vector.shape_cast %142 : vector<128xi32> to vector<1x128xi32>
    %144 = vector.broadcast %137 : vector<1x128xf32> to vector<128x128xf32>
    %145 = arith.cmpf oge, %133, %144 : vector<128x128xf32>
    %c128_i32_36 = arith.constant 128 : i32
    %146 = vector.broadcast %c128_i32_36 : i32 to vector<128x128xi32>
    %147 = arith.select %145, %2, %146 : vector<128x128xi1>, vector<128x128xi32>
    %cst_37 = arith.constant dense<2147483647> : vector<128xi32>
    %148 = vector.multi_reduction <minsi>, %147, %cst_37 [0] : vector<128x128xi32> to vector<128xi32>
    %149 = vector.shape_cast %148 : vector<128xi32> to vector<1x128xi32>
    %150 = vector.broadcast %143 : vector<1x128xi32> to vector<128x128xi32>
    %151 = arith.cmpi eq, %2, %150 : vector<128x128xi32>
    %152 = vector.broadcast %149 : vector<1x128xi32> to vector<128x128xi32>
    %153 = arith.cmpi eq, %2, %152 : vector<128x128xi32>
    %154 = arith.ori %129, %151 : vector<128x128xi1>
    %155 = arith.ori %154, %153 : vector<128x128xi1>
    %156 = vector.broadcast %cst : f32 to vector<128x128xf32>
    %157 = arith.select %151, %156, %131 : vector<128x128xi1>, vector<128x128xf32>
    %158 = vector.broadcast %cst : f32 to vector<128x128xf32>
    %159 = arith.select %153, %158, %133 : vector<128x128xi1>, vector<128x128xf32>
    %c6_i32 = arith.constant 6 : i32
    %cst_38 = arith.constant dense<0xFF800000> : vector<128xf32>
    %160 = vector.multi_reduction <maximumf>, %157, %cst_38 [0] : vector<128x128xf32> to vector<128xf32>
    %161 = vector.shape_cast %160 : vector<128xf32> to vector<1x128xf32>
    %cst_39 = arith.constant dense<0xFF800000> : vector<128xf32>
    %162 = vector.multi_reduction <maximumf>, %159, %cst_39 [0] : vector<128x128xf32> to vector<128xf32>
    %163 = vector.shape_cast %162 : vector<128xf32> to vector<1x128xf32>
    %164 = vector.broadcast %161 : vector<1x128xf32> to vector<128x128xf32>
    %165 = arith.cmpf oge, %157, %164 : vector<128x128xf32>
    %c128_i32_40 = arith.constant 128 : i32
    %166 = vector.broadcast %c128_i32_40 : i32 to vector<128x128xi32>
    %167 = arith.select %165, %2, %166 : vector<128x128xi1>, vector<128x128xi32>
    %cst_41 = arith.constant dense<2147483647> : vector<128xi32>
    %168 = vector.multi_reduction <minsi>, %167, %cst_41 [0] : vector<128x128xi32> to vector<128xi32>
    %169 = vector.shape_cast %168 : vector<128xi32> to vector<1x128xi32>
    %170 = vector.broadcast %163 : vector<1x128xf32> to vector<128x128xf32>
    %171 = arith.cmpf oge, %159, %170 : vector<128x128xf32>
    %c128_i32_42 = arith.constant 128 : i32
    %172 = vector.broadcast %c128_i32_42 : i32 to vector<128x128xi32>
    %173 = arith.select %171, %2, %172 : vector<128x128xi1>, vector<128x128xi32>
    %cst_43 = arith.constant dense<2147483647> : vector<128xi32>
    %174 = vector.multi_reduction <minsi>, %173, %cst_43 [0] : vector<128x128xi32> to vector<128xi32>
    %175 = vector.shape_cast %174 : vector<128xi32> to vector<1x128xi32>
    %176 = vector.broadcast %169 : vector<1x128xi32> to vector<128x128xi32>
    %177 = arith.cmpi eq, %2, %176 : vector<128x128xi32>
    %178 = vector.broadcast %175 : vector<1x128xi32> to vector<128x128xi32>
    %179 = arith.cmpi eq, %2, %178 : vector<128x128xi32>
    %180 = arith.ori %155, %177 : vector<128x128xi1>
    %181 = arith.ori %180, %179 : vector<128x128xi1>
    %182 = vector.broadcast %cst : f32 to vector<128x128xf32>
    %183 = arith.select %177, %182, %157 : vector<128x128xi1>, vector<128x128xf32>
    %184 = vector.broadcast %cst : f32 to vector<128x128xf32>
    %185 = arith.select %179, %184, %159 : vector<128x128xi1>, vector<128x128xf32>
    %c7_i32 = arith.constant 7 : i32
    %cst_44 = arith.constant dense<0xFF800000> : vector<128xf32>
    %186 = vector.multi_reduction <maximumf>, %183, %cst_44 [0] : vector<128x128xf32> to vector<128xf32>
    %187 = vector.shape_cast %186 : vector<128xf32> to vector<1x128xf32>
    %cst_45 = arith.constant dense<0xFF800000> : vector<128xf32>
    %188 = vector.multi_reduction <maximumf>, %185, %cst_45 [0] : vector<128x128xf32> to vector<128xf32>
    %189 = vector.shape_cast %188 : vector<128xf32> to vector<1x128xf32>
    %190 = vector.broadcast %187 : vector<1x128xf32> to vector<128x128xf32>
    %191 = arith.cmpf oge, %183, %190 : vector<128x128xf32>
    %c128_i32_46 = arith.constant 128 : i32
    %192 = vector.broadcast %c128_i32_46 : i32 to vector<128x128xi32>
    %193 = arith.select %191, %2, %192 : vector<128x128xi1>, vector<128x128xi32>
    %cst_47 = arith.constant dense<2147483647> : vector<128xi32>
    %194 = vector.multi_reduction <minsi>, %193, %cst_47 [0] : vector<128x128xi32> to vector<128xi32>
    %195 = vector.shape_cast %194 : vector<128xi32> to vector<1x128xi32>
    %196 = vector.broadcast %189 : vector<1x128xf32> to vector<128x128xf32>
    %197 = arith.cmpf oge, %185, %196 : vector<128x128xf32>
    %c128_i32_48 = arith.constant 128 : i32
    %198 = vector.broadcast %c128_i32_48 : i32 to vector<128x128xi32>
    %199 = arith.select %197, %2, %198 : vector<128x128xi1>, vector<128x128xi32>
    %cst_49 = arith.constant dense<2147483647> : vector<128xi32>
    %200 = vector.multi_reduction <minsi>, %199, %cst_49 [0] : vector<128x128xi32> to vector<128xi32>
    %201 = vector.shape_cast %200 : vector<128xi32> to vector<1x128xi32>
    %202 = vector.broadcast %195 : vector<1x128xi32> to vector<128x128xi32>
    %203 = arith.cmpi eq, %2, %202 : vector<128x128xi32>
    %204 = vector.broadcast %201 : vector<1x128xi32> to vector<128x128xi32>
    %205 = arith.cmpi eq, %2, %204 : vector<128x128xi32>
    %206 = arith.ori %181, %203 : vector<128x128xi1>
    %207 = arith.ori %206, %205 : vector<128x128xi1>
    %208 = vector.broadcast %cst : f32 to vector<128x128xf32>
    %209 = arith.select %203, %208, %183 : vector<128x128xi1>, vector<128x128xf32>
    %210 = vector.broadcast %cst : f32 to vector<128x128xf32>
    %211 = arith.select %205, %210, %185 : vector<128x128xi1>, vector<128x128xf32>
    %212 = arith.subf %0, %1 : vector<128x128xf32>
    %cst_50 = arith.constant 9.99999993E-9 : f32
    %213 = vector.broadcast %cst_50 : f32 to vector<128x128xf32>
    %214 = arith.addf %212, %213 : vector<128x128xf32>
    %215 = arith.mulf %214, %214 : vector<128x128xf32>
    %cst_51 = arith.constant 9.99999993E-9 : f32
    %216 = vector.broadcast %cst_51 : f32 to vector<128x128xf32>
    %217 = arith.mulf %215, %216 : vector<128x128xf32>
    %218 = arith.select %207, %215, %217 : vector<128x128xi1>, vector<128x128xf32>
    %cst_52 = arith.constant dense<0.000000e+00> : vector<128xf32>
    %219 = vector.multi_reduction <add>, %218, %cst_52 [0] : vector<128x128xf32> to vector<128xf32>
    %220 = vector.shape_cast %219 : vector<128xf32> to vector<1x128xf32>
    %cst_53 = arith.constant 9.99999993E-9 : f32
    %221 = vector.broadcast %cst_53 : f32 to vector<1x128xf32>
    %222 = arith.addf %220, %221 : vector<1x128xf32>
    %223 = math.sqrt %222 : vector<1x128xf32>
    %c0_54 = arith.constant 0 : index
    %c0_55 = arith.constant 0 : index
    %224 = vector.load %arg3[%c0_54, %c0_55] : memref<1x128xf32, #tpu.memory_space<vmem>>, vector<1x128xf32>
    tpu.vector_store %arg3[%c0_54, %c0_55], %223 {strides = array<i32>} : memref<1x128xf32, #tpu.memory_space<vmem>>, vector<1x128xf32>,
    return
  }
  func.func @transform_0(%arg0: i32) -> (i32, i32) {
    %c0_i32 = arith.constant 0 : i32
    %c0_i32_0 = arith.constant 0 : i32
    return %c0_i32, %arg0 : i32, i32
  }
  func.func @transform_1(%arg0: i32) -> (i32, i32) {
    %c0_i32 = arith.constant 0 : i32
    %c0_i32_0 = arith.constant 0 : i32
    return %c0_i32, %arg0 : i32, i32
  }
  func.func @transform_2(%arg0: i32) -> (i32, i32) {
    %c0_i32 = arith.constant 0 : i32
    %c0_i32_0 = arith.constant 0 : i32
    return %c0_i32, %arg0 : i32, i32
  }
}

</mosaic_0001>

<llo_original>
// kernel: tpu_custom_call.1
$region0: #{tpu_custom_call.1}
  #allocation0 [shape = 'u32[]', space=smem, size = 0x4, offset = 0x4, fixed_abs, tag = 'smem constant byte address 0x4 - core index']
  #allocation1 [shape = 'u32[144,128]{1,0:T(1,128)}', space=vmem, size = 0x12000, scoped, tag = 'internal scratch']
  %s0 = inlined_call_operand.hbm [shape: f32[128,128], index: 0, kind: input, shape index: {}]
  %s1 = inlined_call_operand.hbm [shape: f32[128,128], index: 1, kind: input, shape index: {}]
  %s2 = inlined_call_operand.hbm [shape: f32[1,128], index: 2, kind: output, shape index: {}]
  %s3 = sld [smem:[#allocation0]]
  $region26: #{tpu_custom_call.1} parent=0
    _
  %s5 = ssub.s32 1, %s3
  %s6 = scalar_select 0, %s5, %s3
  $region1: #{tpu_custom_call.1} parent=0
    #allocation2 [shape = 'u8[65536]{0}', space=vmem, size = 0x10000, scoped, tag = 'input window, operand 0, single buffered']
    #allocation3 [shape = 's32[1]{0}', space=sflag, size = 0x4, scoped, tag = 'scoped memory for tpu_custom_call.1']
    #allocation4 [shape = 's32[1]{0}', space=sflag, size = 0x4, scoped, tag = 'scoped memory for tpu_custom_call.1']
    #allocation5 [shape = 'u8[65536]{0}', space=vmem, size = 0x10000, scoped, tag = 'input window, operand 1, single buffered']
    #allocation6 [shape = 's32[1]{0}', space=sflag, size = 0x4, scoped, tag = 'scoped memory for tpu_custom_call.1']
    #allocation7 [shape = 'u8[512]{0}', space=vmem, size = 0x400, scoped, tag = 'output window, operand 0, single buffered']
    %7 = vsyncpa [#allocation3], 0
    %8 = vsyncpa [#allocation6], 0
    %9 = vsyncpa [#allocation4], 0
    // Predicated region
    $region2: #{tpu_custom_call.1} parent=1 // pred_check
      _
    $region3: #{tpu_custom_call.1} parent=1 // pred_check_branch
      %11 = sbr.rel (0) target = $region5
    $region4: #{tpu_custom_call.1} parent=1 // pred_region
      %s13 = ssub.s32 2048, 2048
      %14 = vsyncadd [#allocation3], %s13
      %s15 = sshll.u32 [#allocation2], 4
      %s16 = int_to_ptr.vmem [resolvable:$true] %s15
      %21 = dma.hbm_to_vmem [thread:$0]  %s0, 2048, %s16, [#allocation3], 128, 128, 8
    $region5: #{tpu_custom_call.1} parent=1 // pred_fallthru
      _
    // Predicated region
    $region6: #{tpu_custom_call.1} parent=1 // pred_check
      _
    $region7: #{tpu_custom_call.1} parent=1 // pred_check_branch
      %23 = sbr.rel (0) target = $region9
    $region8: #{tpu_custom_call.1} parent=1 // pred_region
      %s25 = ssub.s32 2048, 2048
      %26 = vsyncadd [#allocation6], %s25
      %s27 = sshll.u32 [#allocation5], 4
      %s28 = int_to_ptr.vmem [resolvable:$true] %s27
      %33 = dma.hbm_to_vmem [thread:$0]  %s1, 2048, %s28, [#allocation6], 128, 128, 8
    $region9: #{tpu_custom_call.1} parent=1 // pred_fallthru
      _
    // Predicated region
    $region10: #{tpu_custom_call.1} parent=1 // pred_check
      _
    $region11: #{tpu_custom_call.1} parent=1 // pred_check_branch
      %35 = sbr.rel (0) target = $region13
    $region12: #{tpu_custom_call.1} parent=1 // pred_region
      %36 = dma.done [#allocation3], 2048
    $region13: #{tpu_custom_call.1} parent=1 // pred_fallthru
      _
    // Predicated region
    $region14: #{tpu_custom_call.1} parent=1 // pred_check
      _
    $region15: #{tpu_custom_call.1} parent=1 // pred_check_branch
      %38 = sbr.rel (0) target = $region17
    $region16: #{tpu_custom_call.1} parent=1 // pred_region
      %39 = dma.done [#allocation6], 2048
    $region17: #{tpu_custom_call.1} parent=1 // pred_fallthru
      _
    %v40 = vld [vmem:[#allocation2] sm:$0xff]
    %v41 = vld [vmem:[#allocation2 + $0x8] sm:$0xff]
    %v42 = vld [vmem:[#allocation2 + $0x10] sm:$0xff]
    %v43 = vld [vmem:[#allocation2 + $0x18] sm:$0xff]
    %v44 = vld [vmem:[#allocation2 + $0x20] sm:$0xff]
    %v45 = vld [vmem:[#allocation2 + $0x28] sm:$0xff]
    %v46 = vld [vmem:[#allocation2 + $0x30] sm:$0xff]
    %v47 = vld [vmem:[#allocation2 + $0x38] sm:$0xff]
    %v48 = vld [vmem:[#allocation2 + $0x40] sm:$0xff]
    %v49 = vld [vmem:[#allocation2 + $0x48] sm:$0xff]
    %v50 = vld [vmem:[#allocation2 + $0x50] sm:$0xff]
    %v51 = vld [vmem:[#allocation2 + $0x58] sm:$0xff]
    %v52 = vld [vmem:[#allocation2 + $0x60] sm:$0xff]
    %v53 = vld [vmem:[#allocation2 + $0x68] sm:$0xff]
    %v54 = vld [vmem:[#allocation2 + $0x70] sm:$0xff]
    %v55 = vld [vmem:[#allocation2 + $0x78] sm:$0xff]
    %v56 = vld [vmem:[#allocation5] sm:$0xff]
    %v57 = vld [vmem:[#allocation5 + $0x8] sm:$0xff]
    %v58 = vld [vmem:[#allocation5 + $0x10] sm:$0xff]
    %v59 = vld [vmem:[#allocation5 + $0x18] sm:$0xff]
    %v60 = vld [vmem:[#allocation5 + $0x20] sm:$0xff]
    %v61 = vld [vmem:[#allocation5 + $0x28] sm:$0xff]
    %v62 = vld [vmem:[#allocation5 + $0x30] sm:$0xff]
    %v63 = vld [vmem:[#allocation5 + $0x38] sm:$0xff]
    %v64 = vld [vmem:[#allocation5 + $0x40] sm:$0xff]
    %v65 = vld [vmem:[#allocation5 + $0x48] sm:$0xff]
    %v66 = vld [vmem:[#allocation5 + $0x50] sm:$0xff]
    %v67 = vld [vmem:[#allocation5 + $0x58] sm:$0xff]
    %v68 = vld [vmem:[#allocation5 + $0x60] sm:$0xff]
    %v69 = vld [vmem:[#allocation5 + $0x68] sm:$0xff]
    %v70 = vld [vmem:[#allocation5 + $0x70] sm:$0xff]
    %v71 = vld [vmem:[#allocation5 + $0x78] sm:$0xff]
    %v72 = vlaneseq
    %v73 = vshrl.u32 %v72, 7
    %v74 = vadd.s32 %v73, 8
    %v75 = vadd.s32 %v73, 16
    %v76 = vadd.s32 %v73, 24
    %v77 = vadd.s32 %v73, 32
    %v78 = vadd.s32 %v73, 40
    %v79 = vadd.s32 %v73, 48
    %v80 = vadd.s32 %v73, 56
    %v81 = vadd.s32 %v73, 64
    %v82 = vadd.s32 %v73, 72
    %v83 = vadd.s32 %v73, 80
    %v84 = vadd.s32 %v73, 88
    %v85 = vadd.s32 %v73, 96
    %v86 = vadd.s32 %v73, 104
    %v87 = vadd.s32 %v73, 112
    %v88 = vadd.s32 %v73, 120
    %v89 = vmax.f32 %v40, %v44
    %v90 = vmax.f32 %v41, %v45
    %v91 = vmax.f32 %v42, %v46
    %v92 = vmax.f32 %v43, %v47
    %v93 = vmax.f32 %v89, %v48
    %v94 = vmax.f32 %v90, %v49
    %v95 = vmax.f32 %v91, %v50
    %v96 = vmax.f32 %v92, %v51
    %v97 = vmax.f32 %v93, %v52
    %v98 = vmax.f32 %v94, %v53
    %v99 = vmax.f32 %v95, %v54
    %v100 = vmax.f32 %v96, %v55
    %v101 = vmax.f32 %v97, %v98
    %v102 = vmax.f32 %v99, %v100
    %v103 = vmax.f32 %v101, %v102
    %v104 = vrot.slane %v103, 4
    %v105 = vmax.f32 %v103, %v104
    %v106 = vrot.slane %v105, 2
    %v107 = vmax.f32 %v105, %v106
    %v108 = vrot.slane %v107, 1
    %v109 = vmax.f32 %v107, %v108
    %v110 = vmax.f32 %v56, %v60
    %v111 = vmax.f32 %v57, %v61
    %v112 = vmax.f32 %v58, %v62
    %v113 = vmax.f32 %v59, %v63
    %v114 = vmax.f32 %v110, %v64
    %v115 = vmax.f32 %v111, %v65
    %v116 = vmax.f32 %v112, %v66
    %v117 = vmax.f32 %v113, %v67
    %v118 = vmax.f32 %v114, %v68
    %v119 = vmax.f32 %v115, %v69
    %v120 = vmax.f32 %v116, %v70
    %v121 = vmax.f32 %v117, %v71
    %v122 = vmax.f32 %v118, %v119
    %v123 = vmax.f32 %v120, %v121
    %v124 = vmax.f32 %v122, %v123
    %v125 = vrot.slane %v124, 4
    %v126 = vmax.f32 %v124, %v125
    %v127 = vrot.slane %v126, 2
    %v128 = vmax.f32 %v126, %v127
    %v129 = vrot.slane %v128, 1
    %v130 = vmax.f32 %v128, %v129
    %vm131 = vcmp.ge.f32.partialorder %v40, %v109
    %vm132 = vcmp.ge.f32.partialorder %v41, %v109
    %vm133 = vcmp.ge.f32.partialorder %v42, %v109
    %vm134 = vcmp.ge.f32.partialorder %v43, %v109
    %vm135 = vcmp.ge.f32.partialorder %v44, %v109
    %vm136 = vcmp.ge.f32.partialorder %v45, %v109
    %vm137 = vcmp.ge.f32.partialorder %v46, %v109
    %vm138 = vcmp.ge.f32.partialorder %v47, %v109
    %vm139 = vcmp.ge.f32.partialorder %v48, %v109
    %vm140 = vcmp.ge.f32.partialorder %v49, %v109
    %vm141 = vcmp.ge.f32.partialorder %v50, %v109
    %vm142 = vcmp.ge.f32.partialorder %v51, %v109
    %vm143 = vcmp.ge.f32.partialorder %v52, %v109
    %vm144 = vcmp.ge.f32.partialorder %v53, %v109
    %vm145 = vcmp.ge.f32.partialorder %v54, %v109
    %vm146 = vcmp.ge.f32.partialorder %v55, %v109
    %v147 = vsel %vm131, %v73, 128
    %v148 = vsel %vm132, %v74, 128
    %v149 = vsel %vm133, %v75, 128
    %v150 = vsel %vm134, %v76, 128
    %v151 = vsel %vm135, %v77, 128
    %v152 = vsel %vm136, %v78, 128
    %v153 = vsel %vm137, %v79, 128
    %v154 = vsel %vm138, %v80, 128
    %v155 = vsel %vm139, %v81, 128
    %v156 = vsel %vm140, %v82, 128
    %v157 = vsel %vm141, %v83, 128
    %v158 = vsel %vm142, %v84, 128
    %v159 = vsel %vm143, %v85, 128
    %v160 = vsel %vm144, %v86, 128
    %v161 = vsel %vm145, %v87, 128
    %v162 = vsel %vm146, %v88, 128
    %vm163 = vcmp.lt.s32.totalorder %v147, %v151
    %v164 = vsel %vm163, %v147, %v151
    %vm165 = vcmp.lt.s32.totalorder %v148, %v152
    %v166 = vsel %vm165, %v148, %v152
    %vm167 = vcmp.lt.s32.totalorder %v149, %v153
    %v168 = vsel %vm167, %v149, %v153
    %vm169 = vcmp.lt.s32.totalorder %v150, %v154
    %v170 = vsel %vm169, %v150, %v154
    %vm171 = vcmp.lt.s32.totalorder %v164, %v155
    %v172 = vsel %vm171, %v164, %v155
    %vm173 = vcmp.lt.s32.totalorder %v166, %v156
    %v174 = vsel %vm173, %v166, %v156
    %vm175 = vcmp.lt.s32.totalorder %v168, %v157
    %v176 = vsel %vm175, %v168, %v157
    %vm177 = vcmp.lt.s32.totalorder %v170, %v158
    %v178 = vsel %vm177, %v170, %v158
    %vm179 = vcmp.lt.s32.totalorder %v172, %v159
    %v180 = vsel %vm179, %v172, %v159
    %vm181 = vcmp.lt.s32.totalorder %v174, %v160
    %v182 = vsel %vm181, %v174, %v160
    %vm183 = vcmp.lt.s32.totalorder %v176, %v161
    %v184 = vsel %vm183, %v176, %v161
    %vm185 = vcmp.lt.s32.totalorder %v178, %v162
    %v186 = vsel %vm185, %v178, %v162
    %vm187 = vcmp.lt.s32.totalorder %v180, %v182
    %v188 = vsel %vm187, %v180, %v182
    %vm189 = vcmp.lt.s32.totalorder %v184, %v186
    %v190 = vsel %vm189, %v184, %v186
    %vm191 = vcmp.lt.s32.totalorder %v188, %v190
    %v192 = vsel %vm191, %v188, %v190
    %v193 = vrot.slane %v192, 4
    %vm194 = vcmp.lt.s32.totalorder %v192, %v193
    %v195 = vsel %vm194, %v192, %v193
    %v196 = vrot.slane %v195, 2
    %vm197 = vcmp.lt.s32.totalorder %v195, %v196
    %v198 = vsel %vm197, %v195, %v196
    %v199 = vrot.slane %v198, 1
    %vm200 = vcmp.lt.s32.totalorder %v198, %v199
    %v201 = vsel %vm200, %v198, %v199
    %vm202 = vcmp.ge.f32.partialorder %v56, %v130
    %vm203 = vcmp.ge.f32.partialorder %v57, %v130
    %vm204 = vcmp.ge.f32.partialorder %v58, %v130
    %vm205 = vcmp.ge.f32.partialorder %v59, %v130
    %vm206 = vcmp.ge.f32.partialorder %v60, %v130
    %vm207 = vcmp.ge.f32.partialorder %v61, %v130
    %vm208 = vcmp.ge.f32.partialorder %v62, %v130
    %vm209 = vcmp.ge.f32.partialorder %v63, %v130
    %vm210 = vcmp.ge.f32.partialorder %v64, %v130
    %vm211 = vcmp.ge.f32.partialorder %v65, %v130
    %vm212 = vcmp.ge.f32.partialorder %v66, %v130
    %vm213 = vcmp.ge.f32.partialorder %v67, %v130
    %vm214 = vcmp.ge.f32.partialorder %v68, %v130
    %vm215 = vcmp.ge.f32.partialorder %v69, %v130
    %vm216 = vcmp.ge.f32.partialorder %v70, %v130
    %vm217 = vcmp.ge.f32.partialorder %v71, %v130
    %v218 = vsel %vm202, %v73, 128
    %v219 = vsel %vm203, %v74, 128
    %v220 = vsel %vm204, %v75, 128
    %v221 = vsel %vm205, %v76, 128
    %v222 = vsel %vm206, %v77, 128
    %v223 = vsel %vm207, %v78, 128
    %v224 = vsel %vm208, %v79, 128
    %v225 = vsel %vm209, %v80, 128
    %v226 = vsel %vm210, %v81, 128
    %v227 = vsel %vm211, %v82, 128
    %v228 = vsel %vm212, %v83, 128
    %v229 = vsel %vm213, %v84, 128
    %v230 = vsel %vm214, %v85, 128
    %v231 = vsel %vm215, %v86, 128
    %v232 = vsel %vm216, %v87, 128
    %v233 = vsel %vm217, %v88, 128
    %vm234 = vcmp.lt.s32.totalorder %v218, %v222
    %v235 = vsel %vm234, %v218, %v222
    %vm236 = vcmp.lt.s32.totalorder %v219, %v223
    %v237 = vsel %vm236, %v219, %v223
    %vm238 = vcmp.lt.s32.totalorder %v220, %v224
    %v239 = vsel %vm238, %v220, %v224
    %vm240 = vcmp.lt.s32.totalorder %v221, %v225
    %v241 = vsel %vm240, %v221, %v225
    %vm242 = vcmp.lt.s32.totalorder %v235, %v226
    %v243 = vsel %vm242, %v235, %v226
    %vm244 = vcmp.lt.s32.totalorder %v237, %v227
    %v245 = vsel %vm244, %v237, %v227
    %vm246 = vcmp.lt.s32.totalorder %v239, %v228
    %v247 = vsel %vm246, %v239, %v228
    %vm248 = vcmp.lt.s32.totalorder %v241, %v229
    %v249 = vsel %vm248, %v241, %v229
    %vm250 = vcmp.lt.s32.totalorder %v243, %v230
    %v251 = vsel %vm250, %v243, %v230
    %vm252 = vcmp.lt.s32.totalorder %v245, %v231
    %v253 = vsel %vm252, %v245, %v231
    %vm254 = vcmp.lt.s32.totalorder %v247, %v232
    %v255 = vsel %vm254, %v247, %v232
    %vm256 = vcmp.lt.s32.totalorder %v249, %v233
    %v257 = vsel %vm256, %v249, %v233
    %vm258 = vcmp.lt.s32.totalorder %v251, %v253
    %v259 = vsel %vm258, %v251, %v253
    %vm260 = vcmp.lt.s32.totalorder %v255, %v257
    %v261 = vsel %vm260, %v255, %v257
    %vm262 = vcmp.lt.s32.totalorder %v259, %v261
    %v263 = vsel %vm262, %v259, %v261
    %v264 = vrot.slane %v263, 4
    %vm265 = vcmp.lt.s32.totalorder %v263, %v264
    %v266 = vsel %vm265, %v263, %v264
    %v267 = vrot.slane %v266, 2
    %vm268 = vcmp.lt.s32.totalorder %v266, %v267
    %v269 = vsel %vm268, %v266, %v267
    %v270 = vrot.slane %v269, 1
    %vm271 = vcmp.lt.s32.totalorder %v269, %v270
    %v272 = vsel %vm271, %v269, %v270
    %vm273 = vcmp.eq.s32.totalorder %v73, %v201
    %vm274 = vcmp.eq.s32.totalorder %v74, %v201
    %vm275 = vcmp.eq.s32.totalorder %v75, %v201
    %vm276 = vcmp.eq.s32.totalorder %v76, %v201
    %vm277 = vcmp.eq.s32.totalorder %v77, %v201
    %vm278 = vcmp.eq.s32.totalorder %v78, %v201
    %vm279 = vcmp.eq.s32.totalorder %v79, %v201
    %vm280 = vcmp.eq.s32.totalorder %v80, %v201
    %vm281 = vcmp.eq.s32.totalorder %v81, %v201
    %vm282 = vcmp.eq.s32.totalorder %v82, %v201
    %vm283 = vcmp.eq.s32.totalorder %v83, %v201
    %vm284 = vcmp.eq.s32.totalorder %v84, %v201
    %vm285 = vcmp.eq.s32.totalorder %v85, %v201
    %vm286 = vcmp.eq.s32.totalorder %v86, %v201
    %vm287 = vcmp.eq.s32.totalorder %v87, %v201
    %vm288 = vcmp.eq.s32.totalorder %v88, %v201
    %vm289 = vcmp.eq.s32.totalorder %v73, %v272
    %vm290 = vcmp.eq.s32.totalorder %v74, %v272
    %vm291 = vcmp.eq.s32.totalorder %v75, %v272
    %vm292 = vcmp.eq.s32.totalorder %v76, %v272
    %vm293 = vcmp.eq.s32.totalorder %v77, %v272
    %vm294 = vcmp.eq.s32.totalorder %v78, %v272
    %vm295 = vcmp.eq.s32.totalorder %v79, %v272
    %vm296 = vcmp.eq.s32.totalorder %v80, %v272
    %vm297 = vcmp.eq.s32.totalorder %v81, %v272
    %vm298 = vcmp.eq.s32.totalorder %v82, %v272
    %vm299 = vcmp.eq.s32.totalorder %v83, %v272
    %vm300 = vcmp.eq.s32.totalorder %v84, %v272
    %vm301 = vcmp.eq.s32.totalorder %v85, %v272
    %vm302 = vcmp.eq.s32.totalorder %v86, %v272
    %vm303 = vcmp.eq.s32.totalorder %v87, %v272
    %vm304 = vcmp.eq.s32.totalorder %v88, %v272
    %vm305 = vmor %vm273, %vm289
    %vm306 = vmor %vm274, %vm290
    %vm307 = vmor %vm275, %vm291
    %vm308 = vmor %vm276, %vm292
    %vm309 = vmor %vm277, %vm293
    %vm310 = vmor %vm278, %vm294
    %vm311 = vmor %vm279, %vm295
    %vm312 = vmor %vm280, %vm296
    %vm313 = vmor %vm281, %vm297
    %vm314 = vmor %vm282, %vm298
    %vm315 = vmor %vm283, %vm299
    %vm316 = vmor %vm284, %vm300
    %vm317 = vmor %vm285, %vm301
    %vm318 = vmor %vm286, %vm302
    %vm319 = vmor %vm287, %vm303
    %vm320 = vmor %vm288, %vm304
    %v321 = vsel %vm273, -3e+38, %v40
    %v322 = vsel %vm274, -3e+38, %v41
    %v323 = vsel %vm275, -3e+38, %v42
    %v324 = vsel %vm276, -3e+38, %v43
    %v325 = vsel %vm277, -3e+38, %v44
    %v326 = vsel %vm278, -3e+38, %v45
    %v327 = vsel %vm279, -3e+38, %v46
    %v328 = vsel %vm280, -3e+38, %v47
    %v329 = vsel %vm281, -3e+38, %v48
    %v330 = vsel %vm282, -3e+38, %v49
    %v331 = vsel %vm283, -3e+38, %v50
    %v332 = vsel %vm284, -3e+38, %v51
    %v333 = vsel %vm285, -3e+38, %v52
    %v334 = vsel %vm286, -3e+38, %v53
    %v335 = vsel %vm287, -3e+38, %v54
    %v336 = vsel %vm288, -3e+38, %v55
    %v337 = vsel %vm289, -3e+38, %v56
    %v338 = vsel %vm290, -3e+38, %v57
    %v339 = vsel %vm291, -3e+38, %v58
    %v340 = vsel %vm292, -3e+38, %v59
    %v341 = vsel %vm293, -3e+38, %v60
    %v342 = vsel %vm294, -3e+38, %v61
    %v343 = vsel %vm295, -3e+38, %v62
    %v344 = vsel %vm296, -3e+38, %v63
    %v345 = vsel %vm297, -3e+38, %v64
    %v346 = vsel %vm298, -3e+38, %v65
    %v347 = vsel %vm299, -3e+38, %v66
    %v348 = vsel %vm300, -3e+38, %v67
    %v349 = vsel %vm301, -3e+38, %v68
    %v350 = vsel %vm302, -3e+38, %v69
    %v351 = vsel %vm303, -3e+38, %v70
    %v352 = vsel %vm304, -3e+38, %v71
    %v353 = vmax.f32 %v321, %v325
    %v354 = vmax.f32 %v322, %v326
    %v355 = vmax.f32 %v323, %v327
    %v356 = vmax.f32 %v324, %v328
    %v357 = vmax.f32 %v353, %v329
    %v358 = vmax.f32 %v354, %v330
    %v359 = vmax.f32 %v355, %v331
    %v360 = vmax.f32 %v356, %v332
    %v361 = vmax.f32 %v357, %v333
    %v362 = vmax.f32 %v358, %v334
    %v363 = vmax.f32 %v359, %v335
    %v364 = vmax.f32 %v360, %v336
    %v365 = vmax.f32 %v361, %v362
    %v366 = vmax.f32 %v363, %v364
    %v367 = vmax.f32 %v365, %v366
    %v368 = vrot.slane %v367, 4
    %v369 = vmax.f32 %v367, %v368
    %v370 = vrot.slane %v369, 2
    %v371 = vmax.f32 %v369, %v370
    %v372 = vrot.slane %v371, 1
    %v373 = vmax.f32 %v371, %v372
    %v374 = vmax.f32 %v337, %v341
    %v375 = vmax.f32 %v338, %v342
    %v376 = vmax.f32 %v339, %v343
    %v377 = vmax.f32 %v340, %v344
    %v378 = vmax.f32 %v374, %v345
    %v379 = vmax.f32 %v375, %v346
    %v380 = vmax.f32 %v376, %v347
    %v381 = vmax.f32 %v377, %v348
    %v382 = vmax.f32 %v378, %v349
    %v383 = vmax.f32 %v379, %v350
    %v384 = vmax.f32 %v380, %v351
    %v385 = vmax.f32 %v381, %v352
    %v386 = vmax.f32 %v382, %v383
    %v387 = vmax.f32 %v384, %v385
    %v388 = vmax.f32 %v386, %v387
    %v389 = vrot.slane %v388, 4
    %v390 = vmax.f32 %v388, %v389
    %v391 = vrot.slane %v390, 2
    %v392 = vmax.f32 %v390, %v391
    %v393 = vrot.slane %v392, 1
    %v394 = vmax.f32 %v392, %v393
    %vm395 = vcmp.ge.f32.partialorder %v321, %v373
    %vm396 = vcmp.ge.f32.partialorder %v322, %v373
    %vm397 = vcmp.ge.f32.partialorder %v323, %v373
    %vm398 = vcmp.ge.f32.partialorder %v324, %v373
    %vm399 = vcmp.ge.f32.partialorder %v325, %v373
    %vm400 = vcmp.ge.f32.partialorder %v326, %v373
    %vm401 = vcmp.ge.f32.partialorder %v327, %v373
    %vm402 = vcmp.ge.f32.partialorder %v328, %v373
    %vm403 = vcmp.ge.f32.partialorder %v329, %v373
    %vm404 = vcmp.ge.f32.partialorder %v330, %v373
    %vm405 = vcmp.ge.f32.partialorder %v331, %v373
    %vm406 = vcmp.ge.f32.partialorder %v332, %v373
    %vm407 = vcmp.ge.f32.partialorder %v333, %v373
    %vm408 = vcmp.ge.f32.partialorder %v334, %v373
    %vm409 = vcmp.ge.f32.partialorder %v335, %v373
    %vm410 = vcmp.ge.f32.partialorder %v336, %v373
    %v411 = vsel %vm395, %v73, 128
    %v412 = vsel %vm396, %v74, 128
    %v413 = vsel %vm397, %v75, 128
    %v414 = vsel %vm398, %v76, 128
    %v415 = vsel %vm399, %v77, 128
    %v416 = vsel %vm400, %v78, 128
    %v417 = vsel %vm401, %v79, 128
    %v418 = vsel %vm402, %v80, 128
    %v419 = vsel %vm403, %v81, 128
    %v420 = vsel %vm404, %v82, 128
    %v421 = vsel %vm405, %v83, 128
    %v422 = vsel %vm406, %v84, 128
    %v423 = vsel %vm407, %v85, 128
    %v424 = vsel %vm408, %v86, 128
    %v425 = vsel %vm409, %v87, 128
    %v426 = vsel %vm410, %v88, 128
    %vm427 = vcmp.lt.s32.totalorder %v411, %v415
    %v428 = vsel %vm427, %v411, %v415
    %vm429 = vcmp.lt.s32.totalorder %v412, %v416
    %v430 = vsel %vm429, %v412, %v416
    %vm431 = vcmp.lt.s32.totalorder %v413, %v417
    %v432 = vsel %vm431, %v413, %v417
    %vm433 = vcmp.lt.s32.totalorder %v414, %v418
    %v434 = vsel %vm433, %v414, %v418
    %vm435 = vcmp.lt.s32.totalorder %v428, %v419
    %v436 = vsel %vm435, %v428, %v419
    %vm437 = vcmp.lt.s32.totalorder %v430, %v420
    %v438 = vsel %vm437, %v430, %v420
    %vm439 = vcmp.lt.s32.totalorder %v432, %v421
    %v440 = vsel %vm439, %v432, %v421
    %vm441 = vcmp.lt.s32.totalorder %v434, %v422
    %v442 = vsel %vm441, %v434, %v422
    %vm443 = vcmp.lt.s32.totalorder %v436, %v423
    %v444 = vsel %vm443, %v436, %v423
    %vm445 = vcmp.lt.s32.totalorder %v438, %v424
    %v446 = vsel %vm445, %v438, %v424
    %vm447 = vcmp.lt.s32.totalorder %v440, %v425
    %v448 = vsel %vm447, %v440, %v425
    %vm449 = vcmp.lt.s32.totalorder %v442, %v426
    %v450 = vsel %vm449, %v442, %v426
    %vm451 = vcmp.lt.s32.totalorder %v444, %v446
    %v452 = vsel %vm451, %v444, %v446
    %vm453 = vcmp.lt.s32.totalorder %v448, %v450
    %v454 = vsel %vm453, %v448, %v450
    %vm455 = vcmp.lt.s32.totalorder %v452, %v454
    %v456 = vsel %vm455, %v452, %v454
    %v457 = vrot.slane %v456, 4
    %vm458 = vcmp.lt.s32.totalorder %v456, %v457
    %v459 = vsel %vm458, %v456, %v457
    %v460 = vrot.slane %v459, 2
    %vm461 = vcmp.lt.s32.totalorder %v459, %v460
    %v462 = vsel %vm461, %v459, %v460
    %v463 = vrot.slane %v462, 1
    %vm464 = vcmp.lt.s32.totalorder %v462, %v463
    %v465 = vsel %vm464, %v462, %v463
    %vm466 = vcmp.ge.f32.partialorder %v337, %v394
    %vm467 = vcmp.ge.f32.partialorder %v338, %v394
    %vm468 = vcmp.ge.f32.partialorder %v339, %v394
    %vm469 = vcmp.ge.f32.partialorder %v340, %v394
    %vm470 = vcmp.ge.f32.partialorder %v341, %v394
    %vm471 = vcmp.ge.f32.partialorder %v342, %v394
    %vm472 = vcmp.ge.f32.partialorder %v343, %v394
    %vm473 = vcmp.ge.f32.partialorder %v344, %v394
    %vm474 = vcmp.ge.f32.partialorder %v345, %v394
    %vm475 = vcmp.ge.f32.partialorder %v346, %v394
    %vm476 = vcmp.ge.f32.partialorder %v347, %v394
    %vm477 = vcmp.ge.f32.partialorder %v348, %v394
    %vm478 = vcmp.ge.f32.partialorder %v349, %v394
    %vm479 = vcmp.ge.f32.partialorder %v350, %v394
    %vm480 = vcmp.ge.f32.partialorder %v351, %v394
    %vm481 = vcmp.ge.f32.partialorder %v352, %v394
    %v482 = vsel %vm466, %v73, 128
    %v483 = vsel %vm467, %v74, 128
    %v484 = vsel %vm468, %v75, 128
    %v485 = vsel %vm469, %v76, 128
    %v486 = vsel %vm470, %v77, 128
    %v487 = vsel %vm471, %v78, 128
    %v488 = vsel %vm472, %v79, 128
    %v489 = vsel %vm473, %v80, 128
    %v490 = vsel %vm474, %v81, 128
    %v491 = vsel %vm475, %v82, 128
    %v492 = vsel %vm476, %v83, 128
    %v493 = vsel %vm477, %v84, 128
    %v494 = vsel %vm478, %v85, 128
    %v495 = vsel %vm479, %v86, 128
    %v496 = vsel %vm480, %v87, 128
    %v497 = vsel %vm481, %v88, 128
    %vm498 = vcmp.lt.s32.totalorder %v482, %v486
    %v499 = vsel %vm498, %v482, %v486
    %vm500 = vcmp.lt.s32.totalorder %v483, %v487
    %v501 = vsel %vm500, %v483, %v487
    %vm502 = vcmp.lt.s32.totalorder %v484, %v488
    %v503 = vsel %vm502, %v484, %v488
    %vm504 = vcmp.lt.s32.totalorder %v485, %v489
    %v505 = vsel %vm504, %v485, %v489
    %vm506 = vcmp.lt.s32.totalorder %v499, %v490
    %v507 = vsel %vm506, %v499, %v490
    %vm508 = vcmp.lt.s32.totalorder %v501, %v491
    %v509 = vsel %vm508, %v501, %v491
    %vm510 = vcmp.lt.s32.totalorder %v503, %v492
    %v511 = vsel %vm510, %v503, %v492
    %vm512 = vcmp.lt.s32.totalorder %v505, %v493
    %v513 = vsel %vm512, %v505, %v493
    %vm514 = vcmp.lt.s32.totalorder %v507, %v494
    %v515 = vsel %vm514, %v507, %v494
    %vm516 = vcmp.lt.s32.totalorder %v509, %v495
    %v517 = vsel %vm516, %v509, %v495
    %vm518 = vcmp.lt.s32.totalorder %v511, %v496
    %v519 = vsel %vm518, %v511, %v496
    %vm520 = vcmp.lt.s32.totalorder %v513, %v497
    %v521 = vsel %vm520, %v513, %v497
    %vm522 = vcmp.lt.s32.totalorder %v515, %v517
    %v523 = vsel %vm522, %v515, %v517
    %vm524 = vcmp.lt.s32.totalorder %v519, %v521
    %v525 = vsel %vm524, %v519, %v521
    %vm526 = vcmp.lt.s32.totalorder %v523, %v525
    %v527 = vsel %vm526, %v523, %v525
    %v528 = vrot.slane %v527, 4
    %vm529 = vcmp.lt.s32.totalorder %v527, %v528
    %v530 = vsel %vm529, %v527, %v528
    %v531 = vrot.slane %v530, 2
    %vm532 = vcmp.lt.s32.totalorder %v530, %v531
    %v533 = vsel %vm532, %v530, %v531
    %v534 = vrot.slane %v533, 1
    %vm535 = vcmp.lt.s32.totalorder %v533, %v534
    %v536 = vsel %vm535, %v533, %v534
    %vm537 = vcmp.eq.s32.totalorder %v73, %v465
    %vm538 = vcmp.eq.s32.totalorder %v74, %v465
    %vm539 = vcmp.eq.s32.totalorder %v75, %v465
    %vm540 = vcmp.eq.s32.totalorder %v76, %v465
    %vm541 = vcmp.eq.s32.totalorder %v77, %v465
    %vm542 = vcmp.eq.s32.totalorder %v78, %v465
    %vm543 = vcmp.eq.s32.totalorder %v79, %v465
    %vm544 = vcmp.eq.s32.totalorder %v80, %v465
    %vm545 = vcmp.eq.s32.totalorder %v81, %v465
    %vm546 = vcmp.eq.s32.totalorder %v82, %v465
    %vm547 = vcmp.eq.s32.totalorder %v83, %v465
    %vm548 = vcmp.eq.s32.totalorder %v84, %v465
    %vm549 = vcmp.eq.s32.totalorder %v85, %v465
    %vm550 = vcmp.eq.s32.totalorder %v86, %v465
    %vm551 = vcmp.eq.s32.totalorder %v87, %v465
    %vm552 = vcmp.eq.s32.totalorder %v88, %v465
    %vm553 = vcmp.eq.s32.totalorder %v73, %v536
    %vm554 = vcmp.eq.s32.totalorder %v74, %v536
    %vm555 = vcmp.eq.s32.totalorder %v75, %v536
    %vm556 = vcmp.eq.s32.totalorder %v76, %v536
    %vm557 = vcmp.eq.s32.totalorder %v77, %v536
    %vm558 = vcmp.eq.s32.totalorder %v78, %v536
    %vm559 = vcmp.eq.s32.totalorder %v79, %v536
    %vm560 = vcmp.eq.s32.totalorder %v80, %v536
    %vm561 = vcmp.eq.s32.totalorder %v81, %v536
    %vm562 = vcmp.eq.s32.totalorder %v82, %v536
    %vm563 = vcmp.eq.s32.totalorder %v83, %v536
    %vm564 = vcmp.eq.s32.totalorder %v84, %v536
    %vm565 = vcmp.eq.s32.totalorder %v85, %v536
    %vm566 = vcmp.eq.s32.totalorder %v86, %v536
    %vm567 = vcmp.eq.s32.totalorder %v87, %v536
    %vm568 = vcmp.eq.s32.totalorder %v88, %v536
    %vm569 = vmor %vm305, %vm537
    %vm570 = vmor %vm306, %vm538
    %vm571 = vmor %vm307, %vm539
    %vm572 = vmor %vm308, %vm540
    %vm573 = vmor %vm309, %vm541
    %vm574 = vmor %vm310, %vm542
    %vm575 = vmor %vm311, %vm543
    %vm576 = vmor %vm312, %vm544
    %vm577 = vmor %vm313, %vm545
    %vm578 = vmor %vm314, %vm546
    %vm579 = vmor %vm315, %vm547
    %vm580 = vmor %vm316, %vm548
    %vm581 = vmor %vm317, %vm549
    %vm582 = vmor %vm318, %vm550
    %vm583 = vmor %vm319, %vm551
    %vm584 = vmor %vm320, %vm552
    %vm585 = vmor %vm569, %vm553
    %vm586 = vmor %vm570, %vm554
    %vm587 = vmor %vm571, %vm555
    %vm588 = vmor %vm572, %vm556
    %vm589 = vmor %vm573, %vm557
    %vm590 = vmor %vm574, %vm558
    %vm591 = vmor %vm575, %vm559
    %vm592 = vmor %vm576, %vm560
    %vm593 = vmor %vm577, %vm561
    %vm594 = vmor %vm578, %vm562
    %vm595 = vmor %vm579, %vm563
    %vm596 = vmor %vm580, %vm564
    %vm597 = vmor %vm581, %vm565
    %vm598 = vmor %vm582, %vm566
    %vm599 = vmor %vm583, %vm567
    %vm600 = vmor %vm584, %vm568
    %v601 = vsel %vm537, -3e+38, %v321
    %v602 = vsel %vm538, -3e+38, %v322
    %v603 = vsel %vm539, -3e+38, %v323
    %v604 = vsel %vm540, -3e+38, %v324
    %v605 = vsel %vm541, -3e+38, %v325
    %v606 = vsel %vm542, -3e+38, %v326
    %v607 = vsel %vm543, -3e+38, %v327
    %v608 = vsel %vm544, -3e+38, %v328
    %v609 = vsel %vm545, -3e+38, %v329
    %v610 = vsel %vm546, -3e+38, %v330
    %v611 = vsel %vm547, -3e+38, %v331
    %v612 = vsel %vm548, -3e+38, %v332
    %v613 = vsel %vm549, -3e+38, %v333
    %v614 = vsel %vm550, -3e+38, %v334
    %v615 = vsel %vm551, -3e+38, %v335
    %v616 = vsel %vm552, -3e+38, %v336
    %v617 = vsel %vm553, -3e+38, %v337
    %v618 = vsel %vm554, -3e+38, %v338
    %v619 = vsel %vm555, -3e+38, %v339
    %v620 = vsel %vm556, -3e+38, %v340
    %v621 = vsel %vm557, -3e+38, %v341
    %v622 = vsel %vm558, -3e+38, %v342
    %v623 = vsel %vm559, -3e+38, %v343
    %v624 = vsel %vm560, -3e+38, %v344
    %v625 = vsel %vm561, -3e+38, %v345
    %v626 = vsel %vm562, -3e+38, %v346
    %v627 = vsel %vm563, -3e+38, %v347
    %v628 = vsel %vm564, -3e+38, %v348
    %v629 = vsel %vm565, -3e+38, %v349
    %v630 = vsel %vm566, -3e+38, %v350
    %v631 = vsel %vm567, -3e+38, %v351
    %v632 = vsel %vm568, -3e+38, %v352
    %v633 = vmax.f32 %v601, %v605
    %v634 = vmax.f32 %v602, %v606
    %v635 = vmax.f32 %v603, %v607
    %v636 = vmax.f32 %v604, %v608
    %v637 = vmax.f32 %v633, %v609
    %v638 = vmax.f32 %v634, %v610
    %v639 = vmax.f32 %v635, %v611
    %v640 = vmax.f32 %v636, %v612
    %v641 = vmax.f32 %v637, %v613
    %v642 = vmax.f32 %v638, %v614
    %v643 = vmax.f32 %v639, %v615
    %v644 = vmax.f32 %v640, %v616
    %v645 = vmax.f32 %v641, %v642
    %v646 = vmax.f32 %v643, %v644
    %v647 = vmax.f32 %v645, %v646
    %v648 = vrot.slane %v647, 4
    %v649 = vmax.f32 %v647, %v648
    %v650 = vrot.slane %v649, 2
    %v651 = vmax.f32 %v649, %v650
    %v652 = vrot.slane %v651, 1
    %v653 = vmax.f32 %v651, %v652
    %v654 = vmax.f32 %v617, %v621
    %v655 = vmax.f32 %v618, %v622
    %v656 = vmax.f32 %v619, %v623
    %v657 = vmax.f32 %v620, %v624
    %v658 = vmax.f32 %v654, %v625
    %v659 = vmax.f32 %v655, %v626
    %v660 = vmax.f32 %v656, %v627
    %v661 = vmax.f32 %v657, %v628
    %v662 = vmax.f32 %v658, %v629
    %v663 = vmax.f32 %v659, %v630
    %v664 = vmax.f32 %v660, %v631
    %v665 = vmax.f32 %v661, %v632
    %v666 = vmax.f32 %v662, %v663
    %v667 = vmax.f32 %v664, %v665
    %v668 = vmax.f32 %v666, %v667
    %v669 = vrot.slane %v668, 4
    %v670 = vmax.f32 %v668, %v669
    %v671 = vrot.slane %v670, 2
    %v672 = vmax.f32 %v670, %v671
    %v673 = vrot.slane %v672, 1
    %v674 = vmax.f32 %v672, %v673
    %vm675 = vcmp.ge.f32.partialorder %v601, %v653
    %vm676 = vcmp.ge.f32.partialorder %v602, %v653
    %vm677 = vcmp.ge.f32.partialorder %v603, %v653
    %vm678 = vcmp.ge.f32.partialorder %v604, %v653
    %vm679 = vcmp.ge.f32.partialorder %v605, %v653
    %vm680 = vcmp.ge.f32.partialorder %v606, %v653
    %vm681 = vcmp.ge.f32.partialorder %v607, %v653
    %vm682 = vcmp.ge.f32.partialorder %v608, %v653
    %vm683 = vcmp.ge.f32.partialorder %v609, %v653
    %vm684 = vcmp.ge.f32.partialorder %v610, %v653
    %vm685 = vcmp.ge.f32.partialorder %v611, %v653
    %vm686 = vcmp.ge.f32.partialorder %v612, %v653
    %vm687 = vcmp.ge.f32.partialorder %v613, %v653
    %vm688 = vcmp.ge.f32.partialorder %v614, %v653
    %vm689 = vcmp.ge.f32.partialorder %v615, %v653
    %vm690 = vcmp.ge.f32.partialorder %v616, %v653
    %v691 = vsel %vm675, %v73, 128
    %v692 = vsel %vm676, %v74, 128
    %v693 = vsel %vm677, %v75, 128
    %v694 = vsel %vm678, %v76, 128
    %v695 = vsel %vm679, %v77, 128
    %v696 = vsel %vm680, %v78, 128
    %v697 = vsel %vm681, %v79, 128
    %v698 = vsel %vm682, %v80, 128
    %v699 = vsel %vm683, %v81, 128
    %v700 = vsel %vm684, %v82, 128
    %v701 = vsel %vm685, %v83, 128
    %v702 = vsel %vm686, %v84, 128
    %v703 = vsel %vm687, %v85, 128
    %v704 = vsel %vm688, %v86, 128
    %v705 = vsel %vm689, %v87, 128
    %v706 = vsel %vm690, %v88, 128
    %vm707 = vcmp.lt.s32.totalorder %v691, %v695
    %v708 = vsel %vm707, %v691, %v695
    %vm709 = vcmp.lt.s32.totalorder %v692, %v696
    %v710 = vsel %vm709, %v692, %v696
    %vm711 = vcmp.lt.s32.totalorder %v693, %v697
    %v712 = vsel %vm711, %v693, %v697
    %vm713 = vcmp.lt.s32.totalorder %v694, %v698
    %v714 = vsel %vm713, %v694, %v698
    %vm715 = vcmp.lt.s32.totalorder %v708, %v699
    %v716 = vsel %vm715, %v708, %v699
    %vm717 = vcmp.lt.s32.totalorder %v710, %v700
    %v718 = vsel %vm717, %v710, %v700
    %vm719 = vcmp.lt.s32.totalorder %v712, %v701
    %v720 = vsel %vm719, %v712, %v701
    %vm721 = vcmp.lt.s32.totalorder %v714, %v702
    %v722 = vsel %vm721, %v714, %v702
    %vm723 = vcmp.lt.s32.totalorder %v716, %v703
    %v724 = vsel %vm723, %v716, %v703
    %vm725 = vcmp.lt.s32.totalorder %v718, %v704
    %v726 = vsel %vm725, %v718, %v704
    %vm727 = vcmp.lt.s32.totalorder %v720, %v705
    %v728 = vsel %vm727, %v720, %v705
    %vm729 = vcmp.lt.s32.totalorder %v722, %v706
    %v730 = vsel %vm729, %v722, %v706
    %vm731 = vcmp.lt.s32.totalorder %v724, %v726
    %v732 = vsel %vm731, %v724, %v726
    %vm733 = vcmp.lt.s32.totalorder %v728, %v730
    %v734 = vsel %vm733, %v728, %v730
    %vm735 = vcmp.lt.s32.totalorder %v732, %v734
    %v736 = vsel %vm735, %v732, %v734
    %v737 = vrot.slane %v736, 4
    %vm738 = vcmp.lt.s32.totalorder %v736, %v737
    %v739 = vsel %vm738, %v736, %v737
    %v740 = vrot.slane %v739, 2
    %vm741 = vcmp.lt.s32.totalorder %v739, %v740
    %v742 = vsel %vm741, %v739, %v740
    %v743 = vrot.slane %v742, 1
    %vm744 = vcmp.lt.s32.totalorder %v742, %v743
    %v745 = vsel %vm744, %v742, %v743
    %vm746 = vcmp.ge.f32.partialorder %v617, %v674
    %vm747 = vcmp.ge.f32.partialorder %v618, %v674
    %vm748 = vcmp.ge.f32.partialorder %v619, %v674
    %vm749 = vcmp.ge.f32.partialorder %v620, %v674
    %vm750 = vcmp.ge.f32.partialorder %v621, %v674
    %vm751 = vcmp.ge.f32.partialorder %v622, %v674
    %vm752 = vcmp.ge.f32.partialorder %v623, %v674
    %vm753 = vcmp.ge.f32.partialorder %v624, %v674
    %vm754 = vcmp.ge.f32.partialorder %v625, %v674
    %vm755 = vcmp.ge.f32.partialorder %v626, %v674
    %vm756 = vcmp.ge.f32.partialorder %v627, %v674
    %vm757 = vcmp.ge.f32.partialorder %v628, %v674
    %vm758 = vcmp.ge.f32.partialorder %v629, %v674
    %vm759 = vcmp.ge.f32.partialorder %v630, %v674
    %vm760 = vcmp.ge.f32.partialorder %v631, %v674
    %vm761 = vcmp.ge.f32.partialorder %v632, %v674
    %v762 = vsel %vm746, %v73, 128
    %v763 = vsel %vm747, %v74, 128
    %v764 = vsel %vm748, %v75, 128
    %v765 = vsel %vm749, %v76, 128
    %v766 = vsel %vm750, %v77, 128
    %v767 = vsel %vm751, %v78, 128
    %v768 = vsel %vm752, %v79, 128
    %v769 = vsel %vm753, %v80, 128
    %v770 = vsel %vm754, %v81, 128
    %v771 = vsel %vm755, %v82, 128
    %v772 = vsel %vm756, %v83, 128
    %v773 = vsel %vm757, %v84, 128
    %v774 = vsel %vm758, %v85, 128
    %v775 = vsel %vm759, %v86, 128
    %v776 = vsel %vm760, %v87, 128
    %v777 = vsel %vm761, %v88, 128
    %vm778 = vcmp.lt.s32.totalorder %v762, %v766
    %v779 = vsel %vm778, %v762, %v766
    %vm780 = vcmp.lt.s32.totalorder %v763, %v767
    %v781 = vsel %vm780, %v763, %v767
    %vm782 = vcmp.lt.s32.totalorder %v764, %v768
    %v783 = vsel %vm782, %v764, %v768
    %vm784 = vcmp.lt.s32.totalorder %v765, %v769
    %v785 = vsel %vm784, %v765, %v769
    %vm786 = vcmp.lt.s32.totalorder %v779, %v770
    %v787 = vsel %vm786, %v779, %v770
    %vm788 = vcmp.lt.s32.totalorder %v781, %v771
    %v789 = vsel %vm788, %v781, %v771
    %vm790 = vcmp.lt.s32.totalorder %v783, %v772
    %v791 = vsel %vm790, %v783, %v772
    %vm792 = vcmp.lt.s32.totalorder %v785, %v773
    %v793 = vsel %vm792, %v785, %v773
    %vm794 = vcmp.lt.s32.totalorder %v787, %v774
    %v795 = vsel %vm794, %v787, %v774
    %vm796 = vcmp.lt.s32.totalorder %v789, %v775
    %v797 = vsel %vm796, %v789, %v775
    %vm798 = vcmp.lt.s32.totalorder %v791, %v776
    %v799 = vsel %vm798, %v791, %v776
    %vm800 = vcmp.lt.s32.totalorder %v793, %v777
    %v801 = vsel %vm800, %v793, %v777
    %vm802 = vcmp.lt.s32.totalorder %v795, %v797
    %v803 = vsel %vm802, %v795, %v797
    %vm804 = vcmp.lt.s32.totalorder %v799, %v801
    %v805 = vsel %vm804, %v799, %v801
    %vm806 = vcmp.lt.s32.totalorder %v803, %v805
    %v807 = vsel %vm806, %v803, %v805
    %v808 = vrot.slane %v807, 4
    %vm809 = vcmp.lt.s32.totalorder %v807, %v808
    %v810 = vsel %vm809, %v807, %v808
    %v811 = vrot.slane %v810, 2
    %vm812 = vcmp.lt.s32.totalorder %v810, %v811
    %v813 = vsel %vm812, %v810, %v811
    %v814 = vrot.slane %v813, 1
    %vm815 = vcmp.lt.s32.totalorder %v813, %v814
    %v816 = vsel %vm815, %v813, %v814
    %vm817 = vcmp.eq.s32.totalorder %v73, %v745
    %vm818 = vcmp.eq.s32.totalorder %v74, %v745
    %vm819 = vcmp.eq.s32.totalorder %v75, %v745
    %vm820 = vcmp.eq.s32.totalorder %v76, %v745
    %vm821 = vcmp.eq.s32.totalorder %v77, %v745
    %vm822 = vcmp.eq.s32.totalorder %v78, %v745
    %vm823 = vcmp.eq.s32.totalorder %v79, %v745
    %vm824 = vcmp.eq.s32.totalorder %v80, %v745
    %vm825 = vcmp.eq.s32.totalorder %v81, %v745
    %vm826 = vcmp.eq.s32.totalorder %v82, %v745
    %vm827 = vcmp.eq.s32.totalorder %v83, %v745
    %vm828 = vcmp.eq.s32.totalorder %v84, %v745
    %vm829 = vcmp.eq.s32.totalorder %v85, %v745
    %vm830 = vcmp.eq.s32.totalorder %v86, %v745
    %vm831 = vcmp.eq.s32.totalorder %v87, %v745
    %vm832 = vcmp.eq.s32.totalorder %v88, %v745
    %vm833 = vcmp.eq.s32.totalorder %v73, %v816
    %vm834 = vcmp.eq.s32.totalorder %v74, %v816
    %vm835 = vcmp.eq.s32.totalorder %v75, %v816
    %vm836 = vcmp.eq.s32.totalorder %v76, %v816
    %vm837 = vcmp.eq.s32.totalorder %v77, %v816
    %vm838 = vcmp.eq.s32.totalorder %v78, %v816
    %vm839 = vcmp.eq.s32.totalorder %v79, %v816
    %vm840 = vcmp.eq.s32.totalorder %v80, %v816
    %vm841 = vcmp.eq.s32.totalorder %v81, %v816
    %vm842 = vcmp.eq.s32.totalorder %v82, %v816
    %vm843 = vcmp.eq.s32.totalorder %v83, %v816
    %vm844 = vcmp.eq.s32.totalorder %v84, %v816
    %vm845 = vcmp.eq.s32.totalorder %v85, %v816
    %vm846 = vcmp.eq.s32.totalorder %v86, %v816
    %vm847 = vcmp.eq.s32.totalorder %v87, %v816
    %vm848 = vcmp.eq.s32.totalorder %v88, %v816
    %vm849 = vmor %vm585, %vm817
    %vm850 = vmor %vm586, %vm818
    %vm851 = vmor %vm587, %vm819
    %vm852 = vmor %vm588, %vm820
    %vm853 = vmor %vm589, %vm821
    %vm854 = vmor %vm590, %vm822
    %vm855 = vmor %vm591, %vm823
    %vm856 = vmor %vm592, %vm824
    %vm857 = vmor %vm593, %vm825
    %vm858 = vmor %vm594, %vm826
    %vm859 = vmor %vm595, %vm827
    %vm860 = vmor %vm596, %vm828
    %vm861 = vmor %vm597, %vm829
    %vm862 = vmor %vm598, %vm830
    %vm863 = vmor %vm599, %vm831
    %vm864 = vmor %vm600, %vm832
    %vm865 = vmor %vm849, %vm833
    %vm866 = vmor %vm850, %vm834
    %vm867 = vmor %vm851, %vm835
    %vm868 = vmor %vm852, %vm836
    %vm869 = vmor %vm853, %vm837
    %vm870 = vmor %vm854, %vm838
    %vm871 = vmor %vm855, %vm839
    %vm872 = vmor %vm856, %vm840
    %vm873 = vmor %vm857, %vm841
    %vm874 = vmor %vm858, %vm842
    %vm875 = vmor %vm859, %vm843
    %vm876 = vmor %vm860, %vm844
    %vm877 = vmor %vm861, %vm845
    %vm878 = vmor %vm862, %vm846
    %vm879 = vmor %vm863, %vm847
    %vm880 = vmor %vm864, %vm848
    %v881 = vsel %vm817, -3e+38, %v601
    %v882 = vsel %vm818, -3e+38, %v602
    %v883 = vsel %vm819, -3e+38, %v603
    %v884 = vsel %vm820, -3e+38, %v604
    %v885 = vsel %vm821, -3e+38, %v605
    %v886 = vsel %vm822, -3e+38, %v606
    %v887 = vsel %vm823, -3e+38, %v607
    %v888 = vsel %vm824, -3e+38, %v608
    %v889 = vsel %vm825, -3e+38, %v609
    %v890 = vsel %vm826, -3e+38, %v610
    %v891 = vsel %vm827, -3e+38, %v611
    %v892 = vsel %vm828, -3e+38, %v612
    %v893 = vsel %vm829, -3e+38, %v613
    %v894 = vsel %vm830, -3e+38, %v614
    %v895 = vsel %vm831, -3e+38, %v615
    %v896 = vsel %vm832, -3e+38, %v616
    %v897 = vsel %vm833, -3e+38, %v617
    %v898 = vsel %vm834, -3e+38, %v618
    %v899 = vsel %vm835, -3e+38, %v619
    %v900 = vsel %vm836, -3e+38, %v620
    %v901 = vsel %vm837, -3e+38, %v621
    %v902 = vsel %vm838, -3e+38, %v622
    %v903 = vsel %vm839, -3e+38, %v623
    %v904 = vsel %vm840, -3e+38, %v624
    %v905 = vsel %vm841, -3e+38, %v625
    %v906 = vsel %vm842, -3e+38, %v626
    %v907 = vsel %vm843, -3e+38, %v627
    %v908 = vsel %vm844, -3e+38, %v628
    %v909 = vsel %vm845, -3e+38, %v629
    %v910 = vsel %vm846, -3e+38, %v630
    %v911 = vsel %vm847, -3e+38, %v631
    %v912 = vsel %vm848, -3e+38, %v632
    %v913 = vmax.f32 %v881, %v885
    %v914 = vmax.f32 %v882, %v886
    %v915 = vmax.f32 %v883, %v887
    %v916 = vmax.f32 %v884, %v888
    %v917 = vmax.f32 %v913, %v889
    %v918 = vmax.f32 %v914, %v890
    %v919 = vmax.f32 %v915, %v891
    %v920 = vmax.f32 %v916, %v892
    %v921 = vmax.f32 %v917, %v893
    %v922 = vmax.f32 %v918, %v894
    %v923 = vmax.f32 %v919, %v895
    %v924 = vmax.f32 %v920, %v896
    %v925 = vmax.f32 %v921, %v922
    %v926 = vmax.f32 %v923, %v924
    %v927 = vmax.f32 %v925, %v926
    %v928 = vrot.slane %v927, 4
    %v929 = vmax.f32 %v927, %v928
    %v930 = vrot.slane %v929, 2
    %v931 = vmax.f32 %v929, %v930
    %v932 = vrot.slane %v931, 1
    %v933 = vmax.f32 %v931, %v932
    %v934 = vmax.f32 %v897, %v901
    %v935 = vmax.f32 %v898, %v902
    %v936 = vmax.f32 %v899, %v903
    %v937 = vmax.f32 %v900, %v904
    %v938 = vmax.f32 %v934, %v905
    %v939 = vmax.f32 %v935, %v906
    %v940 = vmax.f32 %v936, %v907
    %v941 = vmax.f32 %v937, %v908
    %v942 = vmax.f32 %v938, %v909
    %v943 = vmax.f32 %v939, %v910
    %v944 = vmax.f32 %v940, %v911
    %v945 = vmax.f32 %v941, %v912
    %v946 = vmax.f32 %v942, %v943
    %v947 = vmax.f32 %v944, %v945
    %v948 = vmax.f32 %v946, %v947
    %v949 = vrot.slane %v948, 4
    %v950 = vmax.f32 %v948, %v949
    %v951 = vrot.slane %v950, 2
    %v952 = vmax.f32 %v950, %v951
    %v953 = vrot.slane %v952, 1
    %v954 = vmax.f32 %v952, %v953
    %vm955 = vcmp.ge.f32.partialorder %v881, %v933
    %vm956 = vcmp.ge.f32.partialorder %v882, %v933
    %vm957 = vcmp.ge.f32.partialorder %v883, %v933
    %vm958 = vcmp.ge.f32.partialorder %v884, %v933
    %vm959 = vcmp.ge.f32.partialorder %v885, %v933
    %vm960 = vcmp.ge.f32.partialorder %v886, %v933
    %vm961 = vcmp.ge.f32.partialorder %v887, %v933
    %vm962 = vcmp.ge.f32.partialorder %v888, %v933
    %vm963 = vcmp.ge.f32.partialorder %v889, %v933
    %vm964 = vcmp.ge.f32.partialorder %v890, %v933
    %vm965 = vcmp.ge.f32.partialorder %v891, %v933
    %vm966 = vcmp.ge.f32.partialorder %v892, %v933
    %vm967 = vcmp.ge.f32.partialorder %v893, %v933
    %vm968 = vcmp.ge.f32.partialorder %v894, %v933
    %vm969 = vcmp.ge.f32.partialorder %v895, %v933
    %vm970 = vcmp.ge.f32.partialorder %v896, %v933
    %v971 = vsel %vm955, %v73, 128
    %v972 = vsel %vm956, %v74, 128
    %v973 = vsel %vm957, %v75, 128
    %v974 = vsel %vm958, %v76, 128
    %v975 = vsel %vm959, %v77, 128
    %v976 = vsel %vm960, %v78, 128
    %v977 = vsel %vm961, %v79, 128
    %v978 = vsel %vm962, %v80, 128
    %v979 = vsel %vm963, %v81, 128
    %v980 = vsel %vm964, %v82, 128
    %v981 = vsel %vm965, %v83, 128
    %v982 = vsel %vm966, %v84, 128
    %v983 = vsel %vm967, %v85, 128
    %v984 = vsel %vm968, %v86, 128
    %v985 = vsel %vm969, %v87, 128
    %v986 = vsel %vm970, %v88, 128
    %vm987 = vcmp.lt.s32.totalorder %v971, %v975
    %v988 = vsel %vm987, %v971, %v975
    %vm989 = vcmp.lt.s32.totalorder %v972, %v976
    %v990 = vsel %vm989, %v972, %v976
    %vm991 = vcmp.lt.s32.totalorder %v973, %v977
    %v992 = vsel %vm991, %v973, %v977
    %vm993 = vcmp.lt.s32.totalorder %v974, %v978
    %v994 = vsel %vm993, %v974, %v978
    %vm995 = vcmp.lt.s32.totalorder %v988, %v979
    %v996 = vsel %vm995, %v988, %v979
    %vm997 = vcmp.lt.s32.totalorder %v990, %v980
    %v998 = vsel %vm997, %v990, %v980
    %vm999 = vcmp.lt.s32.totalorder %v992, %v981
    %v1000 = vsel %vm999, %v992, %v981
    %vm1001 = vcmp.lt.s32.totalorder %v994, %v982
    %v1002 = vsel %vm1001, %v994, %v982
    %vm1003 = vcmp.lt.s32.totalorder %v996, %v983
    %v1004 = vsel %vm1003, %v996, %v983
    %vm1005 = vcmp.lt.s32.totalorder %v998, %v984
    %v1006 = vsel %vm1005, %v998, %v984
    %vm1007 = vcmp.lt.s32.totalorder %v1000, %v985
    %v1008 = vsel %vm1007, %v1000, %v985
    %vm1009 = vcmp.lt.s32.totalorder %v1002, %v986
    %v1010 = vsel %vm1009, %v1002, %v986
    %vm1011 = vcmp.lt.s32.totalorder %v1004, %v1006
    %v1012 = vsel %vm1011, %v1004, %v1006
    %vm1013 = vcmp.lt.s32.totalorder %v1008, %v1010
    %v1014 = vsel %vm1013, %v1008, %v1010
    %vm1015 = vcmp.lt.s32.totalorder %v1012, %v1014
    %v1016 = vsel %vm1015, %v1012, %v1014
    %v1017 = vrot.slane %v1016, 4
    %vm1018 = vcmp.lt.s32.totalorder %v1016, %v1017
    %v1019 = vsel %vm1018, %v1016, %v1017
    %v1020 = vrot.slane %v1019, 2
    %vm1021 = vcmp.lt.s32.totalorder %v1019, %v1020
    %v1022 = vsel %vm1021, %v1019, %v1020
    %v1023 = vrot.slane %v1022, 1
    %vm1024 = vcmp.lt.s32.totalorder %v1022, %v1023
    %v1025 = vsel %vm1024, %v1022, %v1023
    %vm1026 = vcmp.ge.f32.partialorder %v897, %v954
    %vm1027 = vcmp.ge.f32.partialorder %v898, %v954
    %vm1028 = vcmp.ge.f32.partialorder %v899, %v954
    %vm1029 = vcmp.ge.f32.partialorder %v900, %v954
    %vm1030 = vcmp.ge.f32.partialorder %v901, %v954
    %vm1031 = vcmp.ge.f32.partialorder %v902, %v954
    %vm1032 = vcmp.ge.f32.partialorder %v903, %v954
    %vm1033 = vcmp.ge.f32.partialorder %v904, %v954
    %vm1034 = vcmp.ge.f32.partialorder %v905, %v954
    %vm1035 = vcmp.ge.f32.partialorder %v906, %v954
    %vm1036 = vcmp.ge.f32.partialorder %v907, %v954
    %vm1037 = vcmp.ge.f32.partialorder %v908, %v954
    %vm1038 = vcmp.ge.f32.partialorder %v909, %v954
    %vm1039 = vcmp.ge.f32.partialorder %v910, %v954
    %vm1040 = vcmp.ge.f32.partialorder %v911, %v954
    %vm1041 = vcmp.ge.f32.partialorder %v912, %v954
    %v1042 = vsel %vm1026, %v73, 128
    %v1043 = vsel %vm1027, %v74, 128
    %v1044 = vsel %vm1028, %v75, 128
    %v1045 = vsel %vm1029, %v76, 128
    %v1046 = vsel %vm1030, %v77, 128
    %v1047 = vsel %vm1031, %v78, 128
    %v1048 = vsel %vm1032, %v79, 128
    %v1049 = vsel %vm1033, %v80, 128
    %v1050 = vsel %vm1034, %v81, 128
    %v1051 = vsel %vm1035, %v82, 128
    %v1052 = vsel %vm1036, %v83, 128
    %v1053 = vsel %vm1037, %v84, 128
    %v1054 = vsel %vm1038, %v85, 128
    %v1055 = vsel %vm1039, %v86, 128
    %v1056 = vsel %vm1040, %v87, 128
    %v1057 = vsel %vm1041, %v88, 128
    %vm1058 = vcmp.lt.s32.totalorder %v1042, %v1046
    %v1059 = vsel %vm1058, %v1042, %v1046
    %vm1060 = vcmp.lt.s32.totalorder %v1043, %v1047
    %v1061 = vsel %vm1060, %v1043, %v1047
    %vm1062 = vcmp.lt.s32.totalorder %v1044, %v1048
    %v1063 = vsel %vm1062, %v1044, %v1048
    %vm1064 = vcmp.lt.s32.totalorder %v1045, %v1049
    %v1065 = vsel %vm1064, %v1045, %v1049
    %vm1066 = vcmp.lt.s32.totalorder %v1059, %v1050
    %v1067 = vsel %vm1066, %v1059, %v1050
    %vm1068 = vcmp.lt.s32.totalorder %v1061, %v1051
    %v1069 = vsel %vm1068, %v1061, %v1051
    %vm1070 = vcmp.lt.s32.totalorder %v1063, %v1052
    %v1071 = vsel %vm1070, %v1063, %v1052
    %vm1072 = vcmp.lt.s32.totalorder %v1065, %v1053
    %v1073 = vsel %vm1072, %v1065, %v1053
    %vm1074 = vcmp.lt.s32.totalorder %v1067, %v1054
    %v1075 = vsel %vm1074, %v1067, %v1054
    %vm1076 = vcmp.lt.s32.totalorder %v1069, %v1055
    %v1077 = vsel %vm1076, %v1069, %v1055
    %vm1078 = vcmp.lt.s32.totalorder %v1071, %v1056
    %v1079 = vsel %vm1078, %v1071, %v1056
    %vm1080 = vcmp.lt.s32.totalorder %v1073, %v1057
    %v1081 = vsel %vm1080, %v1073, %v1057
    %vm1082 = vcmp.lt.s32.totalorder %v1075, %v1077
    %v1083 = vsel %vm1082, %v1075, %v1077
    %vm1084 = vcmp.lt.s32.totalorder %v1079, %v1081
    %v1085 = vsel %vm1084, %v1079, %v1081
    %vm1086 = vcmp.lt.s32.totalorder %v1083, %v1085
    %v1087 = vsel %vm1086, %v1083, %v1085
    %v1088 = vrot.slane %v1087, 4
    %vm1089 = vcmp.lt.s32.totalorder %v1087, %v1088
    %v1090 = vsel %vm1089, %v1087, %v1088
    %v1091 = vrot.slane %v1090, 2
    %vm1092 = vcmp.lt.s32.totalorder %v1090, %v1091
    %v1093 = vsel %vm1092, %v1090, %v1091
    %v1094 = vrot.slane %v1093, 1
    %vm1095 = vcmp.lt.s32.totalorder %v1093, %v1094
    %v1096 = vsel %vm1095, %v1093, %v1094
    %vm1097 = vcmp.eq.s32.totalorder %v73, %v1025
    %vm1098 = vcmp.eq.s32.totalorder %v74, %v1025
    %vm1099 = vcmp.eq.s32.totalorder %v75, %v1025
    %vm1100 = vcmp.eq.s32.totalorder %v76, %v1025
    %vm1101 = vcmp.eq.s32.totalorder %v77, %v1025
    %vm1102 = vcmp.eq.s32.totalorder %v78, %v1025
    %vm1103 = vcmp.eq.s32.totalorder %v79, %v1025
    %vm1104 = vcmp.eq.s32.totalorder %v80, %v1025
    %vm1105 = vcmp.eq.s32.totalorder %v81, %v1025
    %vm1106 = vcmp.eq.s32.totalorder %v82, %v1025
    %vm1107 = vcmp.eq.s32.totalorder %v83, %v1025
    %vm1108 = vcmp.eq.s32.totalorder %v84, %v1025
    %vm1109 = vcmp.eq.s32.totalorder %v85, %v1025
    %vm1110 = vcmp.eq.s32.totalorder %v86, %v1025
    %vm1111 = vcmp.eq.s32.totalorder %v87, %v1025
    %vm1112 = vcmp.eq.s32.totalorder %v88, %v1025
    %vm1113 = vcmp.eq.s32.totalorder %v73, %v1096
    %vm1114 = vcmp.eq.s32.totalorder %v74, %v1096
    %vm1115 = vcmp.eq.s32.totalorder %v75, %v1096
    %vm1116 = vcmp.eq.s32.totalorder %v76, %v1096
    %vm1117 = vcmp.eq.s32.totalorder %v77, %v1096
    %vm1118 = vcmp.eq.s32.totalorder %v78, %v1096
    %vm1119 = vcmp.eq.s32.totalorder %v79, %v1096
    %vm1120 = vcmp.eq.s32.totalorder %v80, %v1096
    %vm1121 = vcmp.eq.s32.totalorder %v81, %v1096
    %vm1122 = vcmp.eq.s32.totalorder %v82, %v1096
    %vm1123 = vcmp.eq.s32.totalorder %v83, %v1096
    %vm1124 = vcmp.eq.s32.totalorder %v84, %v1096
    %vm1125 = vcmp.eq.s32.totalorder %v85, %v1096
    %vm1126 = vcmp.eq.s32.totalorder %v86, %v1096
    %vm1127 = vcmp.eq.s32.totalorder %v87, %v1096
    %vm1128 = vcmp.eq.s32.totalorder %v88, %v1096
    %vm1129 = vmor %vm865, %vm1097
    %vm1130 = vmor %vm866, %vm1098
    %vm1131 = vmor %vm867, %vm1099
    %vm1132 = vmor %vm868, %vm1100
    %vm1133 = vmor %vm869, %vm1101
    %vm1134 = vmor %vm870, %vm1102
    %vm1135 = vmor %vm871, %vm1103
    %vm1136 = vmor %vm872, %vm1104
    %vm1137 = vmor %vm873, %vm1105
    %vm1138 = vmor %vm874, %vm1106
    %vm1139 = vmor %vm875, %vm1107
    %vm1140 = vmor %vm876, %vm1108
    %vm1141 = vmor %vm877, %vm1109
    %vm1142 = vmor %vm878, %vm1110
    %vm1143 = vmor %vm879, %vm1111
    %vm1144 = vmor %vm880, %vm1112
    %vm1145 = vmor %vm1129, %vm1113
    %vm1146 = vmor %vm1130, %vm1114
    %vm1147 = vmor %vm1131, %vm1115
    %vm1148 = vmor %vm1132, %vm1116
    %vm1149 = vmor %vm1133, %vm1117
    %vm1150 = vmor %vm1134, %vm1118
    %vm1151 = vmor %vm1135, %vm1119
    %vm1152 = vmor %vm1136, %vm1120
    %vm1153 = vmor %vm1137, %vm1121
    %vm1154 = vmor %vm1138, %vm1122
    %vm1155 = vmor %vm1139, %vm1123
    %vm1156 = vmor %vm1140, %vm1124
    %vm1157 = vmor %vm1141, %vm1125
    %vm1158 = vmor %vm1142, %vm1126
    %vm1159 = vmor %vm1143, %vm1127
    %vm1160 = vmor %vm1144, %vm1128
    %v1161 = vsel %vm1097, -3e+38, %v881
    %v1162 = vsel %vm1098, -3e+38, %v882
    %v1163 = vsel %vm1099, -3e+38, %v883
    %v1164 = vsel %vm1100, -3e+38, %v884
    %v1165 = vsel %vm1101, -3e+38, %v885
    %v1166 = vsel %vm1102, -3e+38, %v886
    %v1167 = vsel %vm1103, -3e+38, %v887
    %v1168 = vsel %vm1104, -3e+38, %v888
    %v1169 = vsel %vm1105, -3e+38, %v889
    %v1170 = vsel %vm1106, -3e+38, %v890
    %v1171 = vsel %vm1107, -3e+38, %v891
    %v1172 = vsel %vm1108, -3e+38, %v892
    %v1173 = vsel %vm1109, -3e+38, %v893
    %v1174 = vsel %vm1110, -3e+38, %v894
    %v1175 = vsel %vm1111, -3e+38, %v895
    %v1176 = vsel %vm1112, -3e+38, %v896
    %v1177 = vsel %vm1113, -3e+38, %v897
    %v1178 = vsel %vm1114, -3e+38, %v898
    %v1179 = vsel %vm1115, -3e+38, %v899
    %v1180 = vsel %vm1116, -3e+38, %v900
    %v1181 = vsel %vm1117, -3e+38, %v901
    %v1182 = vsel %vm1118, -3e+38, %v902
    %v1183 = vsel %vm1119, -3e+38, %v903
    %v1184 = vsel %vm1120, -3e+38, %v904
    %v1185 = vsel %vm1121, -3e+38, %v905
    %v1186 = vsel %vm1122, -3e+38, %v906
    %v1187 = vsel %vm1123, -3e+38, %v907
    %v1188 = vsel %vm1124, -3e+38, %v908
    %v1189 = vsel %vm1125, -3e+38, %v909
    %v1190 = vsel %vm1126, -3e+38, %v910
    %v1191 = vsel %vm1127, -3e+38, %v911
    %v1192 = vsel %vm1128, -3e+38, %v912
    %v1193 = vmax.f32 %v1161, %v1165
    %v1194 = vmax.f32 %v1162, %v1166
    %v1195 = vmax.f32 %v1163, %v1167
    %v1196 = vmax.f32 %v1164, %v1168
    %v1197 = vmax.f32 %v1193, %v1169
    %v1198 = vmax.f32 %v1194, %v1170
    %v1199 = vmax.f32 %v1195, %v1171
    %v1200 = vmax.f32 %v1196, %v1172
    %v1201 = vmax.f32 %v1197, %v1173
    %v1202 = vmax.f32 %v1198, %v1174
    %v1203 = vmax.f32 %v1199, %v1175
    %v1204 = vmax.f32 %v1200, %v1176
    %v1205 = vmax.f32 %v1201, %v1202
    %v1206 = vmax.f32 %v1203, %v1204
    %v1207 = vmax.f32 %v1205, %v1206
    %v1208 = vrot.slane %v1207, 4
    %v1209 = vmax.f32 %v1207, %v1208
    %v1210 = vrot.slane %v1209, 2
    %v1211 = vmax.f32 %v1209, %v1210
    %v1212 = vrot.slane %v1211, 1
    %v1213 = vmax.f32 %v1211, %v1212
    %v1214 = vmax.f32 %v1177, %v1181
    %v1215 = vmax.f32 %v1178, %v1182
    %v1216 = vmax.f32 %v1179, %v1183
    %v1217 = vmax.f32 %v1180, %v1184
    %v1218 = vmax.f32 %v1214, %v1185
    %v1219 = vmax.f32 %v1215, %v1186
    %v1220 = vmax.f32 %v1216, %v1187
    %v1221 = vmax.f32 %v1217, %v1188
    %v1222 = vmax.f32 %v1218, %v1189
    %v1223 = vmax.f32 %v1219, %v1190
    %v1224 = vmax.f32 %v1220, %v1191
    %v1225 = vmax.f32 %v1221, %v1192
    %v1226 = vmax.f32 %v1222, %v1223
    %v1227 = vmax.f32 %v1224, %v1225
    %v1228 = vmax.f32 %v1226, %v1227
    %v1229 = vrot.slane %v1228, 4
    %v1230 = vmax.f32 %v1228, %v1229
    %v1231 = vrot.slane %v1230, 2
    %v1232 = vmax.f32 %v1230, %v1231
    %v1233 = vrot.slane %v1232, 1
    %v1234 = vmax.f32 %v1232, %v1233
    %vm1235 = vcmp.ge.f32.partialorder %v1161, %v1213
    %vm1236 = vcmp.ge.f32.partialorder %v1162, %v1213
    %vm1237 = vcmp.ge.f32.partialorder %v1163, %v1213
    %vm1238 = vcmp.ge.f32.partialorder %v1164, %v1213
    %vm1239 = vcmp.ge.f32.partialorder %v1165, %v1213
    %vm1240 = vcmp.ge.f32.partialorder %v1166, %v1213
    %vm1241 = vcmp.ge.f32.partialorder %v1167, %v1213
    %vm1242 = vcmp.ge.f32.partialorder %v1168, %v1213
    %vm1243 = vcmp.ge.f32.partialorder %v1169, %v1213
    %vm1244 = vcmp.ge.f32.partialorder %v1170, %v1213
    %vm1245 = vcmp.ge.f32.partialorder %v1171, %v1213
    %vm1246 = vcmp.ge.f32.partialorder %v1172, %v1213
    %vm1247 = vcmp.ge.f32.partialorder %v1173, %v1213
    %vm1248 = vcmp.ge.f32.partialorder %v1174, %v1213
    %vm1249 = vcmp.ge.f32.partialorder %v1175, %v1213
    %vm1250 = vcmp.ge.f32.partialorder %v1176, %v1213
    %v1251 = vsel %vm1235, %v73, 128
    %v1252 = vsel %vm1236, %v74, 128
    %v1253 = vsel %vm1237, %v75, 128
    %v1254 = vsel %vm1238, %v76, 128
    %v1255 = vsel %vm1239, %v77, 128
    %v1256 = vsel %vm1240, %v78, 128
    %v1257 = vsel %vm1241, %v79, 128
    %v1258 = vsel %vm1242, %v80, 128
    %v1259 = vsel %vm1243, %v81, 128
    %v1260 = vsel %vm1244, %v82, 128
    %v1261 = vsel %vm1245, %v83, 128
    %v1262 = vsel %vm1246, %v84, 128
    %v1263 = vsel %vm1247, %v85, 128
    %v1264 = vsel %vm1248, %v86, 128
    %v1265 = vsel %vm1249, %v87, 128
    %v1266 = vsel %vm1250, %v88, 128
    %vm1267 = vcmp.lt.s32.totalorder %v1251, %v1255
    %v1268 = vsel %vm1267, %v1251, %v1255
    %vm1269 = vcmp.lt.s32.totalorder %v1252, %v1256
    %v1270 = vsel %vm1269, %v1252, %v1256
    %vm1271 = vcmp.lt.s32.totalorder %v1253, %v1257
    %v1272 = vsel %vm1271, %v1253, %v1257
    %vm1273 = vcmp.lt.s32.totalorder %v1254, %v1258
    %v1274 = vsel %vm1273, %v1254, %v1258
    %vm1275 = vcmp.lt.s32.totalorder %v1268, %v1259
    %v1276 = vsel %vm1275, %v1268, %v1259
    %vm1277 = vcmp.lt.s32.totalorder %v1270, %v1260
    %v1278 = vsel %vm1277, %v1270, %v1260
    %vm1279 = vcmp.lt.s32.totalorder %v1272, %v1261
    %v1280 = vsel %vm1279, %v1272, %v1261
    %vm1281 = vcmp.lt.s32.totalorder %v1274, %v1262
    %v1282 = vsel %vm1281, %v1274, %v1262
    %vm1283 = vcmp.lt.s32.totalorder %v1276, %v1263
    %v1284 = vsel %vm1283, %v1276, %v1263
    %vm1285 = vcmp.lt.s32.totalorder %v1278, %v1264
    %v1286 = vsel %vm1285, %v1278, %v1264
    %vm1287 = vcmp.lt.s32.totalorder %v1280, %v1265
    %v1288 = vsel %vm1287, %v1280, %v1265
    %vm1289 = vcmp.lt.s32.totalorder %v1282, %v1266
    %v1290 = vsel %vm1289, %v1282, %v1266
    %vm1291 = vcmp.lt.s32.totalorder %v1284, %v1286
    %v1292 = vsel %vm1291, %v1284, %v1286
    %vm1293 = vcmp.lt.s32.totalorder %v1288, %v1290
    %v1294 = vsel %vm1293, %v1288, %v1290
    %vm1295 = vcmp.lt.s32.totalorder %v1292, %v1294
    %v1296 = vsel %vm1295, %v1292, %v1294
    %v1297 = vrot.slane %v1296, 4
    %vm1298 = vcmp.lt.s32.totalorder %v1296, %v1297
    %v1299 = vsel %vm1298, %v1296, %v1297
    %v1300 = vrot.slane %v1299, 2
    %vm1301 = vcmp.lt.s32.totalorder %v1299, %v1300
    %v1302 = vsel %vm1301, %v1299, %v1300
    %v1303 = vrot.slane %v1302, 1
    %vm1304 = vcmp.lt.s32.totalorder %v1302, %v1303
    %v1305 = vsel %vm1304, %v1302, %v1303
    %vm1306 = vcmp.ge.f32.partialorder %v1177, %v1234
    %vm1307 = vcmp.ge.f32.partialorder %v1178, %v1234
    %vm1308 = vcmp.ge.f32.partialorder %v1179, %v1234
    %vm1309 = vcmp.ge.f32.partialorder %v1180, %v1234
    %vm1310 = vcmp.ge.f32.partialorder %v1181, %v1234
    %vm1311 = vcmp.ge.f32.partialorder %v1182, %v1234
    %vm1312 = vcmp.ge.f32.partialorder %v1183, %v1234
    %vm1313 = vcmp.ge.f32.partialorder %v1184, %v1234
    %vm1314 = vcmp.ge.f32.partialorder %v1185, %v1234
    %vm1315 = vcmp.ge.f32.partialorder %v1186, %v1234
    %vm1316 = vcmp.ge.f32.partialorder %v1187, %v1234
    %vm1317 = vcmp.ge.f32.partialorder %v1188, %v1234
    %vm1318 = vcmp.ge.f32.partialorder %v1189, %v1234
    %vm1319 = vcmp.ge.f32.partialorder %v1190, %v1234
    %vm1320 = vcmp.ge.f32.partialorder %v1191, %v1234
    %vm1321 = vcmp.ge.f32.partialorder %v1192, %v1234
    %v1322 = vsel %vm1306, %v73, 128
    %v1323 = vsel %vm1307, %v74, 128
    %v1324 = vsel %vm1308, %v75, 128
    %v1325 = vsel %vm1309, %v76, 128
    %v1326 = vsel %vm1310, %v77, 128
    %v1327 = vsel %vm1311, %v78, 128
    %v1328 = vsel %vm1312, %v79, 128
    %v1329 = vsel %vm1313, %v80, 128
    %v1330 = vsel %vm1314, %v81, 128
    %v1331 = vsel %vm1315, %v82, 128
    %v1332 = vsel %vm1316, %v83, 128
    %v1333 = vsel %vm1317, %v84, 128
    %v1334 = vsel %vm1318, %v85, 128
    %v1335 = vsel %vm1319, %v86, 128
    %v1336 = vsel %vm1320, %v87, 128
    %v1337 = vsel %vm1321, %v88, 128
    %vm1338 = vcmp.lt.s32.totalorder %v1322, %v1326
    %v1339 = vsel %vm1338, %v1322, %v1326
    %vm1340 = vcmp.lt.s32.totalorder %v1323, %v1327
    %v1341 = vsel %vm1340, %v1323, %v1327
    %vm1342 = vcmp.lt.s32.totalorder %v1324, %v1328
    %v1343 = vsel %vm1342, %v1324, %v1328
    %vm1344 = vcmp.lt.s32.totalorder %v1325, %v1329
    %v1345 = vsel %vm1344, %v1325, %v1329
    %vm1346 = vcmp.lt.s32.totalorder %v1339, %v1330
    %v1347 = vsel %vm1346, %v1339, %v1330
    %vm1348 = vcmp.lt.s32.totalorder %v1341, %v1331
    %v1349 = vsel %vm1348, %v1341, %v1331
    %vm1350 = vcmp.lt.s32.totalorder %v1343, %v1332
    %v1351 = vsel %vm1350, %v1343, %v1332
    %vm1352 = vcmp.lt.s32.totalorder %v1345, %v1333
    %v1353 = vsel %vm1352, %v1345, %v1333
    %vm1354 = vcmp.lt.s32.totalorder %v1347, %v1334
    %v1355 = vsel %vm1354, %v1347, %v1334
    %vm1356 = vcmp.lt.s32.totalorder %v1349, %v1335
    %v1357 = vsel %vm1356, %v1349, %v1335
    %vm1358 = vcmp.lt.s32.totalorder %v1351, %v1336
    %v1359 = vsel %vm1358, %v1351, %v1336
    %vm1360 = vcmp.lt.s32.totalorder %v1353, %v1337
    %v1361 = vsel %vm1360, %v1353, %v1337
    %vm1362 = vcmp.lt.s32.totalorder %v1355, %v1357
    %v1363 = vsel %vm1362, %v1355, %v1357
    %vm1364 = vcmp.lt.s32.totalorder %v1359, %v1361
    %v1365 = vsel %vm1364, %v1359, %v1361
    %vm1366 = vcmp.lt.s32.totalorder %v1363, %v1365
    %v1367 = vsel %vm1366, %v1363, %v1365
    %v1368 = vrot.slane %v1367, 4
    %vm1369 = vcmp.lt.s32.totalorder %v1367, %v1368
    %v1370 = vsel %vm1369, %v1367, %v1368
    %v1371 = vrot.slane %v1370, 2
    %vm1372 = vcmp.lt.s32.totalorder %v1370, %v1371
    %v1373 = vsel %vm1372, %v1370, %v1371
    %v1374 = vrot.slane %v1373, 1
    %vm1375 = vcmp.lt.s32.totalorder %v1373, %v1374
    %v1376 = vsel %vm1375, %v1373, %v1374
    %vm1377 = vcmp.eq.s32.totalorder %v73, %v1305
    %vm1378 = vcmp.eq.s32.totalorder %v74, %v1305
    %vm1379 = vcmp.eq.s32.totalorder %v75, %v1305
    %vm1380 = vcmp.eq.s32.totalorder %v76, %v1305
    %vm1381 = vcmp.eq.s32.totalorder %v77, %v1305
    %vm1382 = vcmp.eq.s32.totalorder %v78, %v1305
    %vm1383 = vcmp.eq.s32.totalorder %v79, %v1305
    %vm1384 = vcmp.eq.s32.totalorder %v80, %v1305
    %vm1385 = vcmp.eq.s32.totalorder %v81, %v1305
    %vm1386 = vcmp.eq.s32.totalorder %v82, %v1305
    %vm1387 = vcmp.eq.s32.totalorder %v83, %v1305
    %vm1388 = vcmp.eq.s32.totalorder %v84, %v1305
    %vm1389 = vcmp.eq.s32.totalorder %v85, %v1305
    %vm1390 = vcmp.eq.s32.totalorder %v86, %v1305
    %vm1391 = vcmp.eq.s32.totalorder %v87, %v1305
    %vm1392 = vcmp.eq.s32.totalorder %v88, %v1305
    %vm1393 = vcmp.eq.s32.totalorder %v73, %v1376
    %vm1394 = vcmp.eq.s32.totalorder %v74, %v1376
    %vm1395 = vcmp.eq.s32.totalorder %v75, %v1376
    %vm1396 = vcmp.eq.s32.totalorder %v76, %v1376
    %vm1397 = vcmp.eq.s32.totalorder %v77, %v1376
    %vm1398 = vcmp.eq.s32.totalorder %v78, %v1376
    %vm1399 = vcmp.eq.s32.totalorder %v79, %v1376
    %vm1400 = vcmp.eq.s32.totalorder %v80, %v1376
    %vm1401 = vcmp.eq.s32.totalorder %v81, %v1376
    %vm1402 = vcmp.eq.s32.totalorder %v82, %v1376
    %vm1403 = vcmp.eq.s32.totalorder %v83, %v1376
    %vm1404 = vcmp.eq.s32.totalorder %v84, %v1376
    %vm1405 = vcmp.eq.s32.totalorder %v85, %v1376
    %vm1406 = vcmp.eq.s32.totalorder %v86, %v1376
    %vm1407 = vcmp.eq.s32.totalorder %v87, %v1376
    %vm1408 = vcmp.eq.s32.totalorder %v88, %v1376
    %vm1409 = vmor %vm1145, %vm1377
    %vm1410 = vmor %vm1146, %vm1378
    %vm1411 = vmor %vm1147, %vm1379
    %vm1412 = vmor %vm1148, %vm1380
    %vm1413 = vmor %vm1149, %vm1381
    %vm1414 = vmor %vm1150, %vm1382
    %vm1415 = vmor %vm1151, %vm1383
    %vm1416 = vmor %vm1152, %vm1384
    %vm1417 = vmor %vm1153, %vm1385
    %vm1418 = vmor %vm1154, %vm1386
    %vm1419 = vmor %vm1155, %vm1387
    %vm1420 = vmor %vm1156, %vm1388
    %vm1421 = vmor %vm1157, %vm1389
    %vm1422 = vmor %vm1158, %vm1390
    %vm1423 = vmor %vm1159, %vm1391
    %vm1424 = vmor %vm1160, %vm1392
    %vm1425 = vmor %vm1409, %vm1393
    %vm1426 = vmor %vm1410, %vm1394
    %vm1427 = vmor %vm1411, %vm1395
    %vm1428 = vmor %vm1412, %vm1396
    %vm1429 = vmor %vm1413, %vm1397
    %vm1430 = vmor %vm1414, %vm1398
    %vm1431 = vmor %vm1415, %vm1399
    %vm1432 = vmor %vm1416, %vm1400
    %vm1433 = vmor %vm1417, %vm1401
    %vm1434 = vmor %vm1418, %vm1402
    %vm1435 = vmor %vm1419, %vm1403
    %vm1436 = vmor %vm1420, %vm1404
    %vm1437 = vmor %vm1421, %vm1405
    %vm1438 = vmor %vm1422, %vm1406
    %vm1439 = vmor %vm1423, %vm1407
    %vm1440 = vmor %vm1424, %vm1408
    %v1441 = vsel %vm1377, -3e+38, %v1161
    %v1442 = vsel %vm1378, -3e+38, %v1162
    %v1443 = vsel %vm1379, -3e+38, %v1163
    %v1444 = vsel %vm1380, -3e+38, %v1164
    %v1445 = vsel %vm1381, -3e+38, %v1165
    %v1446 = vsel %vm1382, -3e+38, %v1166
    %v1447 = vsel %vm1383, -3e+38, %v1167
    %v1448 = vsel %vm1384, -3e+38, %v1168
    %v1449 = vsel %vm1385, -3e+38, %v1169
    %v1450 = vsel %vm1386, -3e+38, %v1170
    %v1451 = vsel %vm1387, -3e+38, %v1171
    %v1452 = vsel %vm1388, -3e+38, %v1172
    %v1453 = vsel %vm1389, -3e+38, %v1173
    %v1454 = vsel %vm1390, -3e+38, %v1174
    %v1455 = vsel %vm1391, -3e+38, %v1175
    %v1456 = vsel %vm1392, -3e+38, %v1176
    %v1457 = vsel %vm1393, -3e+38, %v1177
    %v1458 = vsel %vm1394, -3e+38, %v1178
    %v1459 = vsel %vm1395, -3e+38, %v1179
    %v1460 = vsel %vm1396, -3e+38, %v1180
    %v1461 = vsel %vm1397, -3e+38, %v1181
    %v1462 = vsel %vm1398, -3e+38, %v1182
    %v1463 = vsel %vm1399, -3e+38, %v1183
    %v1464 = vsel %vm1400, -3e+38, %v1184
    %v1465 = vsel %vm1401, -3e+38, %v1185
    %v1466 = vsel %vm1402, -3e+38, %v1186
    %v1467 = vsel %vm1403, -3e+38, %v1187
    %v1468 = vsel %vm1404, -3e+38, %v1188
    %v1469 = vsel %vm1405, -3e+38, %v1189
    %v1470 = vsel %vm1406, -3e+38, %v1190
    %v1471 = vsel %vm1407, -3e+38, %v1191
    %v1472 = vsel %vm1408, -3e+38, %v1192
    %v1473 = vmax.f32 %v1441, %v1445
    %v1474 = vmax.f32 %v1442, %v1446
    %v1475 = vmax.f32 %v1443, %v1447
    %v1476 = vmax.f32 %v1444, %v1448
    %v1477 = vmax.f32 %v1473, %v1449
    %v1478 = vmax.f32 %v1474, %v1450
    %v1479 = vmax.f32 %v1475, %v1451
    %v1480 = vmax.f32 %v1476, %v1452
    %v1481 = vmax.f32 %v1477, %v1453
    %v1482 = vmax.f32 %v1478, %v1454
    %v1483 = vmax.f32 %v1479, %v1455
    %v1484 = vmax.f32 %v1480, %v1456
    %v1485 = vmax.f32 %v1481, %v1482
    %v1486 = vmax.f32 %v1483, %v1484
    %v1487 = vmax.f32 %v1485, %v1486
    %v1488 = vrot.slane %v1487, 4
    %v1489 = vmax.f32 %v1487, %v1488
    %v1490 = vrot.slane %v1489, 2
    %v1491 = vmax.f32 %v1489, %v1490
    %v1492 = vrot.slane %v1491, 1
    %v1493 = vmax.f32 %v1491, %v1492
    %v1494 = vmax.f32 %v1457, %v1461
    %v1495 = vmax.f32 %v1458, %v1462
    %v1496 = vmax.f32 %v1459, %v1463
    %v1497 = vmax.f32 %v1460, %v1464
    %v1498 = vmax.f32 %v1494, %v1465
    %v1499 = vmax.f32 %v1495, %v1466
    %v1500 = vmax.f32 %v1496, %v1467
    %v1501 = vmax.f32 %v1497, %v1468
    %v1502 = vmax.f32 %v1498, %v1469
    %v1503 = vmax.f32 %v1499, %v1470
    %v1504 = vmax.f32 %v1500, %v1471
    %v1505 = vmax.f32 %v1501, %v1472
    %v1506 = vmax.f32 %v1502, %v1503
    %v1507 = vmax.f32 %v1504, %v1505
    %v1508 = vmax.f32 %v1506, %v1507
    %v1509 = vrot.slane %v1508, 4
    %v1510 = vmax.f32 %v1508, %v1509
    %v1511 = vrot.slane %v1510, 2
    %v1512 = vmax.f32 %v1510, %v1511
    %v1513 = vrot.slane %v1512, 1
    %v1514 = vmax.f32 %v1512, %v1513
    %vm1515 = vcmp.ge.f32.partialorder %v1441, %v1493
    %vm1516 = vcmp.ge.f32.partialorder %v1442, %v1493
    %vm1517 = vcmp.ge.f32.partialorder %v1443, %v1493
    %vm1518 = vcmp.ge.f32.partialorder %v1444, %v1493
    %vm1519 = vcmp.ge.f32.partialorder %v1445, %v1493
    %vm1520 = vcmp.ge.f32.partialorder %v1446, %v1493
    %vm1521 = vcmp.ge.f32.partialorder %v1447, %v1493
    %vm1522 = vcmp.ge.f32.partialorder %v1448, %v1493
    %vm1523 = vcmp.ge.f32.partialorder %v1449, %v1493
    %vm1524 = vcmp.ge.f32.partialorder %v1450, %v1493
    %vm1525 = vcmp.ge.f32.partialorder %v1451, %v1493
    %vm1526 = vcmp.ge.f32.partialorder %v1452, %v1493
    %vm1527 = vcmp.ge.f32.partialorder %v1453, %v1493
    %vm1528 = vcmp.ge.f32.partialorder %v1454, %v1493
    %vm1529 = vcmp.ge.f32.partialorder %v1455, %v1493
    %vm1530 = vcmp.ge.f32.partialorder %v1456, %v1493
    %v1531 = vsel %vm1515, %v73, 128
    %v1532 = vsel %vm1516, %v74, 128
    %v1533 = vsel %vm1517, %v75, 128
    %v1534 = vsel %vm1518, %v76, 128
    %v1535 = vsel %vm1519, %v77, 128
    %v1536 = vsel %vm1520, %v78, 128
    %v1537 = vsel %vm1521, %v79, 128
    %v1538 = vsel %vm1522, %v80, 128
    %v1539 = vsel %vm1523, %v81, 128
    %v1540 = vsel %vm1524, %v82, 128
    %v1541 = vsel %vm1525, %v83, 128
    %v1542 = vsel %vm1526, %v84, 128
    %v1543 = vsel %vm1527, %v85, 128
    %v1544 = vsel %vm1528, %v86, 128
    %v1545 = vsel %vm1529, %v87, 128
    %v1546 = vsel %vm1530, %v88, 128
    %vm1547 = vcmp.lt.s32.totalorder %v1531, %v1535
    %v1548 = vsel %vm1547, %v1531, %v1535
    %vm1549 = vcmp.lt.s32.totalorder %v1532, %v1536
    %v1550 = vsel %vm1549, %v1532, %v1536
    %vm1551 = vcmp.lt.s32.totalorder %v1533, %v1537
    %v1552 = vsel %vm1551, %v1533, %v1537
    %vm1553 = vcmp.lt.s32.totalorder %v1534, %v1538
    %v1554 = vsel %vm1553, %v1534, %v1538
    %vm1555 = vcmp.lt.s32.totalorder %v1548, %v1539
    %v1556 = vsel %vm1555, %v1548, %v1539
    %vm1557 = vcmp.lt.s32.totalorder %v1550, %v1540
    %v1558 = vsel %vm1557, %v1550, %v1540
    %vm1559 = vcmp.lt.s32.totalorder %v1552, %v1541
    %v1560 = vsel %vm1559, %v1552, %v1541
    %vm1561 = vcmp.lt.s32.totalorder %v1554, %v1542
    %v1562 = vsel %vm1561, %v1554, %v1542
    %vm1563 = vcmp.lt.s32.totalorder %v1556, %v1543
    %v1564 = vsel %vm1563, %v1556, %v1543
    %vm1565 = vcmp.lt.s32.totalorder %v1558, %v1544
    %v1566 = vsel %vm1565, %v1558, %v1544
    %vm1567 = vcmp.lt.s32.totalorder %v1560, %v1545
    %v1568 = vsel %vm1567, %v1560, %v1545
    %vm1569 = vcmp.lt.s32.totalorder %v1562, %v1546
    %v1570 = vsel %vm1569, %v1562, %v1546
    %vm1571 = vcmp.lt.s32.totalorder %v1564, %v1566
    %v1572 = vsel %vm1571, %v1564, %v1566
    %vm1573 = vcmp.lt.s32.totalorder %v1568, %v1570
    %v1574 = vsel %vm1573, %v1568, %v1570
    %vm1575 = vcmp.lt.s32.totalorder %v1572, %v1574
    %v1576 = vsel %vm1575, %v1572, %v1574
    %v1577 = vrot.slane %v1576, 4
    %vm1578 = vcmp.lt.s32.totalorder %v1576, %v1577
    %v1579 = vsel %vm1578, %v1576, %v1577
    %v1580 = vrot.slane %v1579, 2
    %vm1581 = vcmp.lt.s32.totalorder %v1579, %v1580
    %v1582 = vsel %vm1581, %v1579, %v1580
    %v1583 = vrot.slane %v1582, 1
    %vm1584 = vcmp.lt.s32.totalorder %v1582, %v1583
    %v1585 = vsel %vm1584, %v1582, %v1583
    %vm1586 = vcmp.ge.f32.partialorder %v1457, %v1514
    %vm1587 = vcmp.ge.f32.partialorder %v1458, %v1514
    %vm1588 = vcmp.ge.f32.partialorder %v1459, %v1514
    %vm1589 = vcmp.ge.f32.partialorder %v1460, %v1514
    %vm1590 = vcmp.ge.f32.partialorder %v1461, %v1514
    %vm1591 = vcmp.ge.f32.partialorder %v1462, %v1514
    %vm1592 = vcmp.ge.f32.partialorder %v1463, %v1514
    %vm1593 = vcmp.ge.f32.partialorder %v1464, %v1514
    %vm1594 = vcmp.ge.f32.partialorder %v1465, %v1514
    %vm1595 = vcmp.ge.f32.partialorder %v1466, %v1514
    %vm1596 = vcmp.ge.f32.partialorder %v1467, %v1514
    %vm1597 = vcmp.ge.f32.partialorder %v1468, %v1514
    %vm1598 = vcmp.ge.f32.partialorder %v1469, %v1514
    %vm1599 = vcmp.ge.f32.partialorder %v1470, %v1514
    %vm1600 = vcmp.ge.f32.partialorder %v1471, %v1514
    %vm1601 = vcmp.ge.f32.partialorder %v1472, %v1514
    %v1602 = vsel %vm1586, %v73, 128
    %v1603 = vsel %vm1587, %v74, 128
    %v1604 = vsel %vm1588, %v75, 128
    %v1605 = vsel %vm1589, %v76, 128
    %v1606 = vsel %vm1590, %v77, 128
    %v1607 = vsel %vm1591, %v78, 128
    %v1608 = vsel %vm1592, %v79, 128
    %v1609 = vsel %vm1593, %v80, 128
    %v1610 = vsel %vm1594, %v81, 128
    %v1611 = vsel %vm1595, %v82, 128
    %v1612 = vsel %vm1596, %v83, 128
    %v1613 = vsel %vm1597, %v84, 128
    %v1614 = vsel %vm1598, %v85, 128
    %v1615 = vsel %vm1599, %v86, 128
    %v1616 = vsel %vm1600, %v87, 128
    %v1617 = vsel %vm1601, %v88, 128
    %vm1618 = vcmp.lt.s32.totalorder %v1602, %v1606
    %v1619 = vsel %vm1618, %v1602, %v1606
    %vm1620 = vcmp.lt.s32.totalorder %v1603, %v1607
    %v1621 = vsel %vm1620, %v1603, %v1607
    %vm1622 = vcmp.lt.s32.totalorder %v1604, %v1608
    %v1623 = vsel %vm1622, %v1604, %v1608
    %vm1624 = vcmp.lt.s32.totalorder %v1605, %v1609
    %v1625 = vsel %vm1624, %v1605, %v1609
    %vm1626 = vcmp.lt.s32.totalorder %v1619, %v1610
    %v1627 = vsel %vm1626, %v1619, %v1610
    %vm1628 = vcmp.lt.s32.totalorder %v1621, %v1611
    %v1629 = vsel %vm1628, %v1621, %v1611
    %vm1630 = vcmp.lt.s32.totalorder %v1623, %v1612
    %v1631 = vsel %vm1630, %v1623, %v1612
    %vm1632 = vcmp.lt.s32.totalorder %v1625, %v1613
    %v1633 = vsel %vm1632, %v1625, %v1613
    %vm1634 = vcmp.lt.s32.totalorder %v1627, %v1614
    %v1635 = vsel %vm1634, %v1627, %v1614
    %vm1636 = vcmp.lt.s32.totalorder %v1629, %v1615
    %v1637 = vsel %vm1636, %v1629, %v1615
    %vm1638 = vcmp.lt.s32.totalorder %v1631, %v1616
    %v1639 = vsel %vm1638, %v1631, %v1616
    %vm1640 = vcmp.lt.s32.totalorder %v1633, %v1617
    %v1641 = vsel %vm1640, %v1633, %v1617
    %vm1642 = vcmp.lt.s32.totalorder %v1635, %v1637
    %v1643 = vsel %vm1642, %v1635, %v1637
    %vm1644 = vcmp.lt.s32.totalorder %v1639, %v1641
    %v1645 = vsel %vm1644, %v1639, %v1641
    %vm1646 = vcmp.lt.s32.totalorder %v1643, %v1645
    %v1647 = vsel %vm1646, %v1643, %v1645
    %v1648 = vrot.slane %v1647, 4
    %vm1649 = vcmp.lt.s32.totalorder %v1647, %v1648
    %v1650 = vsel %vm1649, %v1647, %v1648
    %v1651 = vrot.slane %v1650, 2
    %vm1652 = vcmp.lt.s32.totalorder %v1650, %v1651
    %v1653 = vsel %vm1652, %v1650, %v1651
    %v1654 = vrot.slane %v1653, 1
    %vm1655 = vcmp.lt.s32.totalorder %v1653, %v1654
    %v1656 = vsel %vm1655, %v1653, %v1654
    %vm1657 = vcmp.eq.s32.totalorder %v73, %v1585
    %vm1658 = vcmp.eq.s32.totalorder %v74, %v1585
    %vm1659 = vcmp.eq.s32.totalorder %v75, %v1585
    %vm1660 = vcmp.eq.s32.totalorder %v76, %v1585
    %vm1661 = vcmp.eq.s32.totalorder %v77, %v1585
    %vm1662 = vcmp.eq.s32.totalorder %v78, %v1585
    %vm1663 = vcmp.eq.s32.totalorder %v79, %v1585
    %vm1664 = vcmp.eq.s32.totalorder %v80, %v1585
    %vm1665 = vcmp.eq.s32.totalorder %v81, %v1585
    %vm1666 = vcmp.eq.s32.totalorder %v82, %v1585
    %vm1667 = vcmp.eq.s32.totalorder %v83, %v1585
    %vm1668 = vcmp.eq.s32.totalorder %v84, %v1585
    %vm1669 = vcmp.eq.s32.totalorder %v85, %v1585
    %vm1670 = vcmp.eq.s32.totalorder %v86, %v1585
    %vm1671 = vcmp.eq.s32.totalorder %v87, %v1585
    %vm1672 = vcmp.eq.s32.totalorder %v88, %v1585
    %vm1673 = vcmp.eq.s32.totalorder %v73, %v1656
    %vm1674 = vcmp.eq.s32.totalorder %v74, %v1656
    %vm1675 = vcmp.eq.s32.totalorder %v75, %v1656
    %vm1676 = vcmp.eq.s32.totalorder %v76, %v1656
    %vm1677 = vcmp.eq.s32.totalorder %v77, %v1656
    %vm1678 = vcmp.eq.s32.totalorder %v78, %v1656
    %vm1679 = vcmp.eq.s32.totalorder %v79, %v1656
    %vm1680 = vcmp.eq.s32.totalorder %v80, %v1656
    %vm1681 = vcmp.eq.s32.totalorder %v81, %v1656
    %vm1682 = vcmp.eq.s32.totalorder %v82, %v1656
    %vm1683 = vcmp.eq.s32.totalorder %v83, %v1656
    %vm1684 = vcmp.eq.s32.totalorder %v84, %v1656
    %vm1685 = vcmp.eq.s32.totalorder %v85, %v1656
    %vm1686 = vcmp.eq.s32.totalorder %v86, %v1656
    %vm1687 = vcmp.eq.s32.totalorder %v87, %v1656
    %vm1688 = vcmp.eq.s32.totalorder %v88, %v1656
    %vm1689 = vmor %vm1425, %vm1657
    %vm1690 = vmor %vm1426, %vm1658
    %vm1691 = vmor %vm1427, %vm1659
    %vm1692 = vmor %vm1428, %vm1660
    %vm1693 = vmor %vm1429, %vm1661
    %vm1694 = vmor %vm1430, %vm1662
    %vm1695 = vmor %vm1431, %vm1663
    %vm1696 = vmor %vm1432, %vm1664
    %vm1697 = vmor %vm1433, %vm1665
    %vm1698 = vmor %vm1434, %vm1666
    %vm1699 = vmor %vm1435, %vm1667
    %vm1700 = vmor %vm1436, %vm1668
    %vm1701 = vmor %vm1437, %vm1669
    %vm1702 = vmor %vm1438, %vm1670
    %vm1703 = vmor %vm1439, %vm1671
    %vm1704 = vmor %vm1440, %vm1672
    %vm1705 = vmor %vm1689, %vm1673
    %vm1706 = vmor %vm1690, %vm1674
    %vm1707 = vmor %vm1691, %vm1675
    %vm1708 = vmor %vm1692, %vm1676
    %vm1709 = vmor %vm1693, %vm1677
    %vm1710 = vmor %vm1694, %vm1678
    %vm1711 = vmor %vm1695, %vm1679
    %vm1712 = vmor %vm1696, %vm1680
    %vm1713 = vmor %vm1697, %vm1681
    %vm1714 = vmor %vm1698, %vm1682
    %vm1715 = vmor %vm1699, %vm1683
    %vm1716 = vmor %vm1700, %vm1684
    %vm1717 = vmor %vm1701, %vm1685
    %vm1718 = vmor %vm1702, %vm1686
    %vm1719 = vmor %vm1703, %vm1687
    %vm1720 = vmor %vm1704, %vm1688
    %v1721 = vsel %vm1657, -3e+38, %v1441
    %v1722 = vsel %vm1658, -3e+38, %v1442
    %v1723 = vsel %vm1659, -3e+38, %v1443
    %v1724 = vsel %vm1660, -3e+38, %v1444
    %v1725 = vsel %vm1661, -3e+38, %v1445
    %v1726 = vsel %vm1662, -3e+38, %v1446
    %v1727 = vsel %vm1663, -3e+38, %v1447
    %v1728 = vsel %vm1664, -3e+38, %v1448
    %v1729 = vsel %vm1665, -3e+38, %v1449
    %v1730 = vsel %vm1666, -3e+38, %v1450
    %v1731 = vsel %vm1667, -3e+38, %v1451
    %v1732 = vsel %vm1668, -3e+38, %v1452
    %v1733 = vsel %vm1669, -3e+38, %v1453
    %v1734 = vsel %vm1670, -3e+38, %v1454
    %v1735 = vsel %vm1671, -3e+38, %v1455
    %v1736 = vsel %vm1672, -3e+38, %v1456
    %v1737 = vsel %vm1673, -3e+38, %v1457
    %v1738 = vsel %vm1674, -3e+38, %v1458
    %v1739 = vsel %vm1675, -3e+38, %v1459
    %v1740 = vsel %vm1676, -3e+38, %v1460
    %v1741 = vsel %vm1677, -3e+38, %v1461
    %v1742 = vsel %vm1678, -3e+38, %v1462
    %v1743 = vsel %vm1679, -3e+38, %v1463
    %v1744 = vsel %vm1680, -3e+38, %v1464
    %v1745 = vsel %vm1681, -3e+38, %v1465
    %v1746 = vsel %vm1682, -3e+38, %v1466
    %v1747 = vsel %vm1683, -3e+38, %v1467
    %v1748 = vsel %vm1684, -3e+38, %v1468
    %v1749 = vsel %vm1685, -3e+38, %v1469
    %v1750 = vsel %vm1686, -3e+38, %v1470
    %v1751 = vsel %vm1687, -3e+38, %v1471
    %v1752 = vsel %vm1688, -3e+38, %v1472
    %v1753 = vmax.f32 %v1721, %v1725
    %v1754 = vmax.f32 %v1722, %v1726
    %v1755 = vmax.f32 %v1723, %v1727
    %v1756 = vmax.f32 %v1724, %v1728
    %v1757 = vmax.f32 %v1753, %v1729
    %v1758 = vmax.f32 %v1754, %v1730
    %v1759 = vmax.f32 %v1755, %v1731
    %v1760 = vmax.f32 %v1756, %v1732
    %v1761 = vmax.f32 %v1757, %v1733
    %v1762 = vmax.f32 %v1758, %v1734
    %v1763 = vmax.f32 %v1759, %v1735
    %v1764 = vmax.f32 %v1760, %v1736
    %v1765 = vmax.f32 %v1761, %v1762
    %v1766 = vmax.f32 %v1763, %v1764
    %v1767 = vmax.f32 %v1765, %v1766
    %v1768 = vrot.slane %v1767, 4
    %v1769 = vmax.f32 %v1767, %v1768
    %v1770 = vrot.slane %v1769, 2
    %v1771 = vmax.f32 %v1769, %v1770
    %v1772 = vrot.slane %v1771, 1
    %v1773 = vmax.f32 %v1771, %v1772
    %v1774 = vmax.f32 %v1737, %v1741
    %v1775 = vmax.f32 %v1738, %v1742
    %v1776 = vmax.f32 %v1739, %v1743
    %v1777 = vmax.f32 %v1740, %v1744
    %v1778 = vmax.f32 %v1774, %v1745
    %v1779 = vmax.f32 %v1775, %v1746
    %v1780 = vmax.f32 %v1776, %v1747
    %v1781 = vmax.f32 %v1777, %v1748
    %v1782 = vmax.f32 %v1778, %v1749
    %v1783 = vmax.f32 %v1779, %v1750
    %v1784 = vmax.f32 %v1780, %v1751
    %v1785 = vmax.f32 %v1781, %v1752
    %v1786 = vmax.f32 %v1782, %v1783
    %v1787 = vmax.f32 %v1784, %v1785
    %v1788 = vmax.f32 %v1786, %v1787
    %v1789 = vrot.slane %v1788, 4
    %v1790 = vmax.f32 %v1788, %v1789
    %v1791 = vrot.slane %v1790, 2
    %v1792 = vmax.f32 %v1790, %v1791
    %v1793 = vrot.slane %v1792, 1
    %v1794 = vmax.f32 %v1792, %v1793
    %vm1795 = vcmp.ge.f32.partialorder %v1721, %v1773
    %vm1796 = vcmp.ge.f32.partialorder %v1722, %v1773
    %vm1797 = vcmp.ge.f32.partialorder %v1723, %v1773
    %vm1798 = vcmp.ge.f32.partialorder %v1724, %v1773
    %vm1799 = vcmp.ge.f32.partialorder %v1725, %v1773
    %vm1800 = vcmp.ge.f32.partialorder %v1726, %v1773
    %vm1801 = vcmp.ge.f32.partialorder %v1727, %v1773
    %vm1802 = vcmp.ge.f32.partialorder %v1728, %v1773
    %vm1803 = vcmp.ge.f32.partialorder %v1729, %v1773
    %vm1804 = vcmp.ge.f32.partialorder %v1730, %v1773
    %vm1805 = vcmp.ge.f32.partialorder %v1731, %v1773
    %vm1806 = vcmp.ge.f32.partialorder %v1732, %v1773
    %vm1807 = vcmp.ge.f32.partialorder %v1733, %v1773
    %vm1808 = vcmp.ge.f32.partialorder %v1734, %v1773
    %vm1809 = vcmp.ge.f32.partialorder %v1735, %v1773
    %vm1810 = vcmp.ge.f32.partialorder %v1736, %v1773
    %v1811 = vsel %vm1795, %v73, 128
    %v1812 = vsel %vm1796, %v74, 128
    %v1813 = vsel %vm1797, %v75, 128
    %v1814 = vsel %vm1798, %v76, 128
    %v1815 = vsel %vm1799, %v77, 128
    %v1816 = vsel %vm1800, %v78, 128
    %v1817 = vsel %vm1801, %v79, 128
    %v1818 = vsel %vm1802, %v80, 128
    %v1819 = vsel %vm1803, %v81, 128
    %v1820 = vsel %vm1804, %v82, 128
    %v1821 = vsel %vm1805, %v83, 128
    %v1822 = vsel %vm1806, %v84, 128
    %v1823 = vsel %vm1807, %v85, 128
    %v1824 = vsel %vm1808, %v86, 128
    %v1825 = vsel %vm1809, %v87, 128
    %v1826 = vsel %vm1810, %v88, 128
    %vm1827 = vcmp.lt.s32.totalorder %v1811, %v1815
    %v1828 = vsel %vm1827, %v1811, %v1815
    %vm1829 = vcmp.lt.s32.totalorder %v1812, %v1816
    %v1830 = vsel %vm1829, %v1812, %v1816
    %vm1831 = vcmp.lt.s32.totalorder %v1813, %v1817
    %v1832 = vsel %vm1831, %v1813, %v1817
    %vm1833 = vcmp.lt.s32.totalorder %v1814, %v1818
    %v1834 = vsel %vm1833, %v1814, %v1818
    %vm1835 = vcmp.lt.s32.totalorder %v1828, %v1819
    %v1836 = vsel %vm1835, %v1828, %v1819
    %vm1837 = vcmp.lt.s32.totalorder %v1830, %v1820
    %v1838 = vsel %vm1837, %v1830, %v1820
    %vm1839 = vcmp.lt.s32.totalorder %v1832, %v1821
    %v1840 = vsel %vm1839, %v1832, %v1821
    %vm1841 = vcmp.lt.s32.totalorder %v1834, %v1822
    %v1842 = vsel %vm1841, %v1834, %v1822
    %vm1843 = vcmp.lt.s32.totalorder %v1836, %v1823
    %v1844 = vsel %vm1843, %v1836, %v1823
    %vm1845 = vcmp.lt.s32.totalorder %v1838, %v1824
    %v1846 = vsel %vm1845, %v1838, %v1824
    %vm1847 = vcmp.lt.s32.totalorder %v1840, %v1825
    %v1848 = vsel %vm1847, %v1840, %v1825
    %vm1849 = vcmp.lt.s32.totalorder %v1842, %v1826
    %v1850 = vsel %vm1849, %v1842, %v1826
    %vm1851 = vcmp.lt.s32.totalorder %v1844, %v1846
    %v1852 = vsel %vm1851, %v1844, %v1846
    %vm1853 = vcmp.lt.s32.totalorder %v1848, %v1850
    %v1854 = vsel %vm1853, %v1848, %v1850
    %vm1855 = vcmp.lt.s32.totalorder %v1852, %v1854
    %v1856 = vsel %vm1855, %v1852, %v1854
    %v1857 = vrot.slane %v1856, 4
    %vm1858 = vcmp.lt.s32.totalorder %v1856, %v1857
    %v1859 = vsel %vm1858, %v1856, %v1857
    %v1860 = vrot.slane %v1859, 2
    %vm1861 = vcmp.lt.s32.totalorder %v1859, %v1860
    %v1862 = vsel %vm1861, %v1859, %v1860
    %v1863 = vrot.slane %v1862, 1
    %vm1864 = vcmp.lt.s32.totalorder %v1862, %v1863
    %v1865 = vsel %vm1864, %v1862, %v1863
    %vm1866 = vcmp.ge.f32.partialorder %v1737, %v1794
    %vm1867 = vcmp.ge.f32.partialorder %v1738, %v1794
    %vm1868 = vcmp.ge.f32.partialorder %v1739, %v1794
    %vm1869 = vcmp.ge.f32.partialorder %v1740, %v1794
    %vm1870 = vcmp.ge.f32.partialorder %v1741, %v1794
    %vm1871 = vcmp.ge.f32.partialorder %v1742, %v1794
    %vm1872 = vcmp.ge.f32.partialorder %v1743, %v1794
    %vm1873 = vcmp.ge.f32.partialorder %v1744, %v1794
    %vm1874 = vcmp.ge.f32.partialorder %v1745, %v1794
    %vm1875 = vcmp.ge.f32.partialorder %v1746, %v1794
    %vm1876 = vcmp.ge.f32.partialorder %v1747, %v1794
    %vm1877 = vcmp.ge.f32.partialorder %v1748, %v1794
    %vm1878 = vcmp.ge.f32.partialorder %v1749, %v1794
    %vm1879 = vcmp.ge.f32.partialorder %v1750, %v1794
    %vm1880 = vcmp.ge.f32.partialorder %v1751, %v1794
    %vm1881 = vcmp.ge.f32.partialorder %v1752, %v1794
    %v1882 = vsel %vm1866, %v73, 128
    %v1883 = vsel %vm1867, %v74, 128
    %v1884 = vsel %vm1868, %v75, 128
    %v1885 = vsel %vm1869, %v76, 128
    %v1886 = vsel %vm1870, %v77, 128
    %v1887 = vsel %vm1871, %v78, 128
    %v1888 = vsel %vm1872, %v79, 128
    %v1889 = vsel %vm1873, %v80, 128
    %v1890 = vsel %vm1874, %v81, 128
    %v1891 = vsel %vm1875, %v82, 128
    %v1892 = vsel %vm1876, %v83, 128
    %v1893 = vsel %vm1877, %v84, 128
    %v1894 = vsel %vm1878, %v85, 128
    %v1895 = vsel %vm1879, %v86, 128
    %v1896 = vsel %vm1880, %v87, 128
    %v1897 = vsel %vm1881, %v88, 128
    %vm1898 = vcmp.lt.s32.totalorder %v1882, %v1886
    %v1899 = vsel %vm1898, %v1882, %v1886
    %vm1900 = vcmp.lt.s32.totalorder %v1883, %v1887
    %v1901 = vsel %vm1900, %v1883, %v1887
    %vm1902 = vcmp.lt.s32.totalorder %v1884, %v1888
    %v1903 = vsel %vm1902, %v1884, %v1888
    %vm1904 = vcmp.lt.s32.totalorder %v1885, %v1889
    %v1905 = vsel %vm1904, %v1885, %v1889
    %vm1906 = vcmp.lt.s32.totalorder %v1899, %v1890
    %v1907 = vsel %vm1906, %v1899, %v1890
    %vm1908 = vcmp.lt.s32.totalorder %v1901, %v1891
    %v1909 = vsel %vm1908, %v1901, %v1891
    %vm1910 = vcmp.lt.s32.totalorder %v1903, %v1892
    %v1911 = vsel %vm1910, %v1903, %v1892
    %vm1912 = vcmp.lt.s32.totalorder %v1905, %v1893
    %v1913 = vsel %vm1912, %v1905, %v1893
    %vm1914 = vcmp.lt.s32.totalorder %v1907, %v1894
    %v1915 = vsel %vm1914, %v1907, %v1894
    %vm1916 = vcmp.lt.s32.totalorder %v1909, %v1895
    %v1917 = vsel %vm1916, %v1909, %v1895
    %vm1918 = vcmp.lt.s32.totalorder %v1911, %v1896
    %v1919 = vsel %vm1918, %v1911, %v1896
    %vm1920 = vcmp.lt.s32.totalorder %v1913, %v1897
    %v1921 = vsel %vm1920, %v1913, %v1897
    %vm1922 = vcmp.lt.s32.totalorder %v1915, %v1917
    %v1923 = vsel %vm1922, %v1915, %v1917
    %vm1924 = vcmp.lt.s32.totalorder %v1919, %v1921
    %v1925 = vsel %vm1924, %v1919, %v1921
    %vm1926 = vcmp.lt.s32.totalorder %v1923, %v1925
    %v1927 = vsel %vm1926, %v1923, %v1925
    %v1928 = vrot.slane %v1927, 4
    %vm1929 = vcmp.lt.s32.totalorder %v1927, %v1928
    %v1930 = vsel %vm1929, %v1927, %v1928
    %v1931 = vrot.slane %v1930, 2
    %vm1932 = vcmp.lt.s32.totalorder %v1930, %v1931
    %v1933 = vsel %vm1932, %v1930, %v1931
    %v1934 = vrot.slane %v1933, 1
    %vm1935 = vcmp.lt.s32.totalorder %v1933, %v1934
    %v1936 = vsel %vm1935, %v1933, %v1934
    %vm1937 = vcmp.eq.s32.totalorder %v73, %v1865
    %vm1938 = vcmp.eq.s32.totalorder %v74, %v1865
    %vm1939 = vcmp.eq.s32.totalorder %v75, %v1865
    %vm1940 = vcmp.eq.s32.totalorder %v76, %v1865
    %vm1941 = vcmp.eq.s32.totalorder %v77, %v1865
    %vm1942 = vcmp.eq.s32.totalorder %v78, %v1865
    %vm1943 = vcmp.eq.s32.totalorder %v79, %v1865
    %vm1944 = vcmp.eq.s32.totalorder %v80, %v1865
    %vm1945 = vcmp.eq.s32.totalorder %v81, %v1865
    %vm1946 = vcmp.eq.s32.totalorder %v82, %v1865
    %vm1947 = vcmp.eq.s32.totalorder %v83, %v1865
    %vm1948 = vcmp.eq.s32.totalorder %v84, %v1865
    %vm1949 = vcmp.eq.s32.totalorder %v85, %v1865
    %vm1950 = vcmp.eq.s32.totalorder %v86, %v1865
    %vm1951 = vcmp.eq.s32.totalorder %v87, %v1865
    %vm1952 = vcmp.eq.s32.totalorder %v88, %v1865
    %vm1953 = vcmp.eq.s32.totalorder %v73, %v1936
    %vm1954 = vcmp.eq.s32.totalorder %v74, %v1936
    %vm1955 = vcmp.eq.s32.totalorder %v75, %v1936
    %vm1956 = vcmp.eq.s32.totalorder %v76, %v1936
    %vm1957 = vcmp.eq.s32.totalorder %v77, %v1936
    %vm1958 = vcmp.eq.s32.totalorder %v78, %v1936
    %vm1959 = vcmp.eq.s32.totalorder %v79, %v1936
    %vm1960 = vcmp.eq.s32.totalorder %v80, %v1936
    %vm1961 = vcmp.eq.s32.totalorder %v81, %v1936
    %vm1962 = vcmp.eq.s32.totalorder %v82, %v1936
    %vm1963 = vcmp.eq.s32.totalorder %v83, %v1936
    %vm1964 = vcmp.eq.s32.totalorder %v84, %v1936
    %vm1965 = vcmp.eq.s32.totalorder %v85, %v1936
    %vm1966 = vcmp.eq.s32.totalorder %v86, %v1936
    %vm1967 = vcmp.eq.s32.totalorder %v87, %v1936
    %vm1968 = vcmp.eq.s32.totalorder %v88, %v1936
    %vm1969 = vmor %vm1705, %vm1937
    %vm1970 = vmor %vm1706, %vm1938
    %vm1971 = vmor %vm1707, %vm1939
    %vm1972 = vmor %vm1708, %vm1940
    %vm1973 = vmor %vm1709, %vm1941
    %vm1974 = vmor %vm1710, %vm1942
    %vm1975 = vmor %vm1711, %vm1943
    %vm1976 = vmor %vm1712, %vm1944
    %vm1977 = vmor %vm1713, %vm1945
    %vm1978 = vmor %vm1714, %vm1946
    %vm1979 = vmor %vm1715, %vm1947
    %vm1980 = vmor %vm1716, %vm1948
    %vm1981 = vmor %vm1717, %vm1949
    %vm1982 = vmor %vm1718, %vm1950
    %vm1983 = vmor %vm1719, %vm1951
    %vm1984 = vmor %vm1720, %vm1952
    %vm1985 = vmor %vm1969, %vm1953
    %vm1986 = vmor %vm1970, %vm1954
    %vm1987 = vmor %vm1971, %vm1955
    %vm1988 = vmor %vm1972, %vm1956
    %vm1989 = vmor %vm1973, %vm1957
    %vm1990 = vmor %vm1974, %vm1958
    %vm1991 = vmor %vm1975, %vm1959
    %vm1992 = vmor %vm1976, %vm1960
    %vm1993 = vmor %vm1977, %vm1961
    %vm1994 = vmor %vm1978, %vm1962
    %vm1995 = vmor %vm1979, %vm1963
    %vm1996 = vmor %vm1980, %vm1964
    %vm1997 = vmor %vm1981, %vm1965
    %vm1998 = vmor %vm1982, %vm1966
    %vm1999 = vmor %vm1983, %vm1967
    %vm2000 = vmor %vm1984, %vm1968
    %v2001 = vsel %vm1937, -3e+38, %v1721
    %v2002 = vsel %vm1938, -3e+38, %v1722
    %v2003 = vsel %vm1939, -3e+38, %v1723
    %v2004 = vsel %vm1940, -3e+38, %v1724
    %v2005 = vsel %vm1941, -3e+38, %v1725
    %v2006 = vsel %vm1942, -3e+38, %v1726
    %v2007 = vsel %vm1943, -3e+38, %v1727
    %v2008 = vsel %vm1944, -3e+38, %v1728
    %v2009 = vsel %vm1945, -3e+38, %v1729
    %v2010 = vsel %vm1946, -3e+38, %v1730
    %v2011 = vsel %vm1947, -3e+38, %v1731
    %v2012 = vsel %vm1948, -3e+38, %v1732
    %v2013 = vsel %vm1949, -3e+38, %v1733
    %v2014 = vsel %vm1950, -3e+38, %v1734
    %v2015 = vsel %vm1951, -3e+38, %v1735
    %v2016 = vsel %vm1952, -3e+38, %v1736
    %v2017 = vsel %vm1953, -3e+38, %v1737
    %v2018 = vsel %vm1954, -3e+38, %v1738
    %v2019 = vsel %vm1955, -3e+38, %v1739
    %v2020 = vsel %vm1956, -3e+38, %v1740
    %v2021 = vsel %vm1957, -3e+38, %v1741
    %v2022 = vsel %vm1958, -3e+38, %v1742
    %v2023 = vsel %vm1959, -3e+38, %v1743
    %v2024 = vsel %vm1960, -3e+38, %v1744
    %v2025 = vsel %vm1961, -3e+38, %v1745
    %v2026 = vsel %vm1962, -3e+38, %v1746
    %v2027 = vsel %vm1963, -3e+38, %v1747
    %v2028 = vsel %vm1964, -3e+38, %v1748
    %v2029 = vsel %vm1965, -3e+38, %v1749
    %v2030 = vsel %vm1966, -3e+38, %v1750
    %v2031 = vsel %vm1967, -3e+38, %v1751
    %v2032 = vsel %vm1968, -3e+38, %v1752
    %v2033 = vmax.f32 %v2001, %v2005
    %v2034 = vmax.f32 %v2002, %v2006
    %v2035 = vmax.f32 %v2003, %v2007
    %v2036 = vmax.f32 %v2004, %v2008
    %v2037 = vmax.f32 %v2033, %v2009
    %v2038 = vmax.f32 %v2034, %v2010
    %v2039 = vmax.f32 %v2035, %v2011
    %v2040 = vmax.f32 %v2036, %v2012
    %v2041 = vmax.f32 %v2037, %v2013
    %v2042 = vmax.f32 %v2038, %v2014
    %v2043 = vmax.f32 %v2039, %v2015
    %v2044 = vmax.f32 %v2040, %v2016
    %v2045 = vmax.f32 %v2041, %v2042
    %v2046 = vmax.f32 %v2043, %v2044
    %v2047 = vmax.f32 %v2045, %v2046
    %v2048 = vrot.slane %v2047, 4
    %v2049 = vmax.f32 %v2047, %v2048
    %v2050 = vrot.slane %v2049, 2
    %v2051 = vmax.f32 %v2049, %v2050
    %v2052 = vrot.slane %v2051, 1
    %v2053 = vmax.f32 %v2051, %v2052
    %v2054 = vmax.f32 %v2017, %v2021
    %v2055 = vmax.f32 %v2018, %v2022
    %v2056 = vmax.f32 %v2019, %v2023
    %v2057 = vmax.f32 %v2020, %v2024
    %v2058 = vmax.f32 %v2054, %v2025
    %v2059 = vmax.f32 %v2055, %v2026
    %v2060 = vmax.f32 %v2056, %v2027
    %v2061 = vmax.f32 %v2057, %v2028
    %v2062 = vmax.f32 %v2058, %v2029
    %v2063 = vmax.f32 %v2059, %v2030
    %v2064 = vmax.f32 %v2060, %v2031
    %v2065 = vmax.f32 %v2061, %v2032
    %v2066 = vmax.f32 %v2062, %v2063
    %v2067 = vmax.f32 %v2064, %v2065
    %v2068 = vmax.f32 %v2066, %v2067
    %v2069 = vrot.slane %v2068, 4
    %v2070 = vmax.f32 %v2068, %v2069
    %v2071 = vrot.slane %v2070, 2
    %v2072 = vmax.f32 %v2070, %v2071
    %v2073 = vrot.slane %v2072, 1
    %v2074 = vmax.f32 %v2072, %v2073
    %vm2075 = vcmp.ge.f32.partialorder %v2001, %v2053
    %vm2076 = vcmp.ge.f32.partialorder %v2002, %v2053
    %vm2077 = vcmp.ge.f32.partialorder %v2003, %v2053
    %vm2078 = vcmp.ge.f32.partialorder %v2004, %v2053
    %vm2079 = vcmp.ge.f32.partialorder %v2005, %v2053
    %vm2080 = vcmp.ge.f32.partialorder %v2006, %v2053
    %vm2081 = vcmp.ge.f32.partialorder %v2007, %v2053
    %vm2082 = vcmp.ge.f32.partialorder %v2008, %v2053
    %vm2083 = vcmp.ge.f32.partialorder %v2009, %v2053
    %vm2084 = vcmp.ge.f32.partialorder %v2010, %v2053
    %vm2085 = vcmp.ge.f32.partialorder %v2011, %v2053
    %vm2086 = vcmp.ge.f32.partialorder %v2012, %v2053
    %vm2087 = vcmp.ge.f32.partialorder %v2013, %v2053
    %vm2088 = vcmp.ge.f32.partialorder %v2014, %v2053
    %vm2089 = vcmp.ge.f32.partialorder %v2015, %v2053
    %vm2090 = vcmp.ge.f32.partialorder %v2016, %v2053
    %v2091 = vsel %vm2075, %v73, 128
    %v2092 = vsel %vm2076, %v74, 128
    %v2093 = vsel %vm2077, %v75, 128
    %v2094 = vsel %vm2078, %v76, 128
    %v2095 = vsel %vm2079, %v77, 128
    %v2096 = vsel %vm2080, %v78, 128
    %v2097 = vsel %vm2081, %v79, 128
    %v2098 = vsel %vm2082, %v80, 128
    %v2099 = vsel %vm2083, %v81, 128
    %v2100 = vsel %vm2084, %v82, 128
    %v2101 = vsel %vm2085, %v83, 128
    %v2102 = vsel %vm2086, %v84, 128
    %v2103 = vsel %vm2087, %v85, 128
    %v2104 = vsel %vm2088, %v86, 128
    %v2105 = vsel %vm2089, %v87, 128
    %v2106 = vsel %vm2090, %v88, 128
    %vm2107 = vcmp.lt.s32.totalorder %v2091, %v2095
    %v2108 = vsel %vm2107, %v2091, %v2095
    %vm2109 = vcmp.lt.s32.totalorder %v2092, %v2096
    %v2110 = vsel %vm2109, %v2092, %v2096
    %vm2111 = vcmp.lt.s32.totalorder %v2093, %v2097
    %v2112 = vsel %vm2111, %v2093, %v2097
    %vm2113 = vcmp.lt.s32.totalorder %v2094, %v2098
    %v2114 = vsel %vm2113, %v2094, %v2098
    %vm2115 = vcmp.lt.s32.totalorder %v2108, %v2099
    %v2116 = vsel %vm2115, %v2108, %v2099
    %vm2117 = vcmp.lt.s32.totalorder %v2110, %v2100
    %v2118 = vsel %vm2117, %v2110, %v2100
    %vm2119 = vcmp.lt.s32.totalorder %v2112, %v2101
    %v2120 = vsel %vm2119, %v2112, %v2101
    %vm2121 = vcmp.lt.s32.totalorder %v2114, %v2102
    %v2122 = vsel %vm2121, %v2114, %v2102
    %vm2123 = vcmp.lt.s32.totalorder %v2116, %v2103
    %v2124 = vsel %vm2123, %v2116, %v2103
    %vm2125 = vcmp.lt.s32.totalorder %v2118, %v2104
    %v2126 = vsel %vm2125, %v2118, %v2104
    %vm2127 = vcmp.lt.s32.totalorder %v2120, %v2105
    %v2128 = vsel %vm2127, %v2120, %v2105
    %vm2129 = vcmp.lt.s32.totalorder %v2122, %v2106
    %v2130 = vsel %vm2129, %v2122, %v2106
    %vm2131 = vcmp.lt.s32.totalorder %v2124, %v2126
    %v2132 = vsel %vm2131, %v2124, %v2126
    %vm2133 = vcmp.lt.s32.totalorder %v2128, %v2130
    %v2134 = vsel %vm2133, %v2128, %v2130
    %vm2135 = vcmp.lt.s32.totalorder %v2132, %v2134
    %v2136 = vsel %vm2135, %v2132, %v2134
    %v2137 = vrot.slane %v2136, 4
    %vm2138 = vcmp.lt.s32.totalorder %v2136, %v2137
    %v2139 = vsel %vm2138, %v2136, %v2137
    %v2140 = vrot.slane %v2139, 2
    %vm2141 = vcmp.lt.s32.totalorder %v2139, %v2140
    %v2142 = vsel %vm2141, %v2139, %v2140
    %v2143 = vrot.slane %v2142, 1
    %vm2144 = vcmp.lt.s32.totalorder %v2142, %v2143
    %v2145 = vsel %vm2144, %v2142, %v2143
    %vm2146 = vcmp.ge.f32.partialorder %v2017, %v2074
    %vm2147 = vcmp.ge.f32.partialorder %v2018, %v2074
    %vm2148 = vcmp.ge.f32.partialorder %v2019, %v2074
    %vm2149 = vcmp.ge.f32.partialorder %v2020, %v2074
    %vm2150 = vcmp.ge.f32.partialorder %v2021, %v2074
    %vm2151 = vcmp.ge.f32.partialorder %v2022, %v2074
    %vm2152 = vcmp.ge.f32.partialorder %v2023, %v2074
    %vm2153 = vcmp.ge.f32.partialorder %v2024, %v2074
    %vm2154 = vcmp.ge.f32.partialorder %v2025, %v2074
    %vm2155 = vcmp.ge.f32.partialorder %v2026, %v2074
    %vm2156 = vcmp.ge.f32.partialorder %v2027, %v2074
    %vm2157 = vcmp.ge.f32.partialorder %v2028, %v2074
    %vm2158 = vcmp.ge.f32.partialorder %v2029, %v2074
    %vm2159 = vcmp.ge.f32.partialorder %v2030, %v2074
    %vm2160 = vcmp.ge.f32.partialorder %v2031, %v2074
    %vm2161 = vcmp.ge.f32.partialorder %v2032, %v2074
    %v2162 = vsel %vm2146, %v73, 128
    %v2163 = vsel %vm2147, %v74, 128
    %v2164 = vsel %vm2148, %v75, 128
    %v2165 = vsel %vm2149, %v76, 128
    %v2166 = vsel %vm2150, %v77, 128
    %v2167 = vsel %vm2151, %v78, 128
    %v2168 = vsel %vm2152, %v79, 128
    %v2169 = vsel %vm2153, %v80, 128
    %v2170 = vsel %vm2154, %v81, 128
    %v2171 = vsel %vm2155, %v82, 128
    %v2172 = vsel %vm2156, %v83, 128
    %v2173 = vsel %vm2157, %v84, 128
    %v2174 = vsel %vm2158, %v85, 128
    %v2175 = vsel %vm2159, %v86, 128
    %v2176 = vsel %vm2160, %v87, 128
    %v2177 = vsel %vm2161, %v88, 128
    %vm2178 = vcmp.lt.s32.totalorder %v2162, %v2166
    %v2179 = vsel %vm2178, %v2162, %v2166
    %vm2180 = vcmp.lt.s32.totalorder %v2163, %v2167
    %v2181 = vsel %vm2180, %v2163, %v2167
    %vm2182 = vcmp.lt.s32.totalorder %v2164, %v2168
    %v2183 = vsel %vm2182, %v2164, %v2168
    %vm2184 = vcmp.lt.s32.totalorder %v2165, %v2169
    %v2185 = vsel %vm2184, %v2165, %v2169
    %vm2186 = vcmp.lt.s32.totalorder %v2179, %v2170
    %v2187 = vsel %vm2186, %v2179, %v2170
    %vm2188 = vcmp.lt.s32.totalorder %v2181, %v2171
    %v2189 = vsel %vm2188, %v2181, %v2171
    %vm2190 = vcmp.lt.s32.totalorder %v2183, %v2172
    %v2191 = vsel %vm2190, %v2183, %v2172
    %vm2192 = vcmp.lt.s32.totalorder %v2185, %v2173
    %v2193 = vsel %vm2192, %v2185, %v2173
    %vm2194 = vcmp.lt.s32.totalorder %v2187, %v2174
    %v2195 = vsel %vm2194, %v2187, %v2174
    %vm2196 = vcmp.lt.s32.totalorder %v2189, %v2175
    %v2197 = vsel %vm2196, %v2189, %v2175
    %vm2198 = vcmp.lt.s32.totalorder %v2191, %v2176
    %v2199 = vsel %vm2198, %v2191, %v2176
    %vm2200 = vcmp.lt.s32.totalorder %v2193, %v2177
    %v2201 = vsel %vm2200, %v2193, %v2177
    %vm2202 = vcmp.lt.s32.totalorder %v2195, %v2197
    %v2203 = vsel %vm2202, %v2195, %v2197
    %vm2204 = vcmp.lt.s32.totalorder %v2199, %v2201
    %v2205 = vsel %vm2204, %v2199, %v2201
    %vm2206 = vcmp.lt.s32.totalorder %v2203, %v2205
    %v2207 = vsel %vm2206, %v2203, %v2205
    %v2208 = vrot.slane %v2207, 4
    %vm2209 = vcmp.lt.s32.totalorder %v2207, %v2208
    %v2210 = vsel %vm2209, %v2207, %v2208
    %v2211 = vrot.slane %v2210, 2
    %vm2212 = vcmp.lt.s32.totalorder %v2210, %v2211
    %v2213 = vsel %vm2212, %v2210, %v2211
    %v2214 = vrot.slane %v2213, 1
    %vm2215 = vcmp.lt.s32.totalorder %v2213, %v2214
    %v2216 = vsel %vm2215, %v2213, %v2214
    %vm2217 = vcmp.eq.s32.totalorder %v73, %v2145
    %vm2218 = vcmp.eq.s32.totalorder %v74, %v2145
    %vm2219 = vcmp.eq.s32.totalorder %v75, %v2145
    %vm2220 = vcmp.eq.s32.totalorder %v76, %v2145
    %vm2221 = vcmp.eq.s32.totalorder %v77, %v2145
    %vm2222 = vcmp.eq.s32.totalorder %v78, %v2145
    %vm2223 = vcmp.eq.s32.totalorder %v79, %v2145
    %vm2224 = vcmp.eq.s32.totalorder %v80, %v2145
    %vm2225 = vcmp.eq.s32.totalorder %v81, %v2145
    %vm2226 = vcmp.eq.s32.totalorder %v82, %v2145
    %vm2227 = vcmp.eq.s32.totalorder %v83, %v2145
    %vm2228 = vcmp.eq.s32.totalorder %v84, %v2145
    %vm2229 = vcmp.eq.s32.totalorder %v85, %v2145
    %vm2230 = vcmp.eq.s32.totalorder %v86, %v2145
    %vm2231 = vcmp.eq.s32.totalorder %v87, %v2145
    %vm2232 = vcmp.eq.s32.totalorder %v88, %v2145
    %vm2233 = vcmp.eq.s32.totalorder %v73, %v2216
    %vm2234 = vcmp.eq.s32.totalorder %v74, %v2216
    %vm2235 = vcmp.eq.s32.totalorder %v75, %v2216
    %vm2236 = vcmp.eq.s32.totalorder %v76, %v2216
    %vm2237 = vcmp.eq.s32.totalorder %v77, %v2216
    %vm2238 = vcmp.eq.s32.totalorder %v78, %v2216
    %vm2239 = vcmp.eq.s32.totalorder %v79, %v2216
    %vm2240 = vcmp.eq.s32.totalorder %v80, %v2216
    %vm2241 = vcmp.eq.s32.totalorder %v81, %v2216
    %vm2242 = vcmp.eq.s32.totalorder %v82, %v2216
    %vm2243 = vcmp.eq.s32.totalorder %v83, %v2216
    %vm2244 = vcmp.eq.s32.totalorder %v84, %v2216
    %vm2245 = vcmp.eq.s32.totalorder %v85, %v2216
    %vm2246 = vcmp.eq.s32.totalorder %v86, %v2216
    %vm2247 = vcmp.eq.s32.totalorder %v87, %v2216
    %vm2248 = vcmp.eq.s32.totalorder %v88, %v2216
    %vm2249 = vmor %vm1985, %vm2217
    %vm2250 = vmor %vm1986, %vm2218
    %vm2251 = vmor %vm1987, %vm2219
    %vm2252 = vmor %vm1988, %vm2220
    %vm2253 = vmor %vm1989, %vm2221
    %vm2254 = vmor %vm1990, %vm2222
    %vm2255 = vmor %vm1991, %vm2223
    %vm2256 = vmor %vm1992, %vm2224
    %vm2257 = vmor %vm1993, %vm2225
    %vm2258 = vmor %vm1994, %vm2226
    %vm2259 = vmor %vm1995, %vm2227
    %vm2260 = vmor %vm1996, %vm2228
    %vm2261 = vmor %vm1997, %vm2229
    %vm2262 = vmor %vm1998, %vm2230
    %vm2263 = vmor %vm1999, %vm2231
    %vm2264 = vmor %vm2000, %vm2232
    %vm2265 = vmor %vm2249, %vm2233
    %vm2266 = vmor %vm2250, %vm2234
    %vm2267 = vmor %vm2251, %vm2235
    %vm2268 = vmor %vm2252, %vm2236
    %vm2269 = vmor %vm2253, %vm2237
    %vm2270 = vmor %vm2254, %vm2238
    %vm2271 = vmor %vm2255, %vm2239
    %vm2272 = vmor %vm2256, %vm2240
    %vm2273 = vmor %vm2257, %vm2241
    %vm2274 = vmor %vm2258, %vm2242
    %vm2275 = vmor %vm2259, %vm2243
    %vm2276 = vmor %vm2260, %vm2244
    %vm2277 = vmor %vm2261, %vm2245
    %vm2278 = vmor %vm2262, %vm2246
    %vm2279 = vmor %vm2263, %vm2247
    %vm2280 = vmor %vm2264, %vm2248
    %v2281 = vsub.f32 %v40, %v56
    %v2282 = vsub.f32 %v41, %v57
    %v2283 = vsub.f32 %v42, %v58
    %v2284 = vsub.f32 %v43, %v59
    %v2285 = vsub.f32 %v44, %v60
    %v2286 = vsub.f32 %v45, %v61
    %v2287 = vsub.f32 %v46, %v62
    %v2288 = vsub.f32 %v47, %v63
    %v2289 = vsub.f32 %v48, %v64
    %v2290 = vsub.f32 %v49, %v65
    %v2291 = vsub.f32 %v50, %v66
    %v2292 = vsub.f32 %v51, %v67
    %v2293 = vsub.f32 %v52, %v68
    %v2294 = vsub.f32 %v53, %v69
    %v2295 = vsub.f32 %v54, %v70
    %v2296 = vsub.f32 %v55, %v71
    %v2297 = vadd.f32 %v2281, 1e-08
    %v2298 = vadd.f32 %v2282, 1e-08
    %v2299 = vadd.f32 %v2283, 1e-08
    %v2300 = vadd.f32 %v2284, 1e-08
    %v2301 = vadd.f32 %v2285, 1e-08
    %v2302 = vadd.f32 %v2286, 1e-08
    %v2303 = vadd.f32 %v2287, 1e-08
    %v2304 = vadd.f32 %v2288, 1e-08
    %v2305 = vadd.f32 %v2289, 1e-08
    %v2306 = vadd.f32 %v2290, 1e-08
    %v2307 = vadd.f32 %v2291, 1e-08
    %v2308 = vadd.f32 %v2292, 1e-08
    %v2309 = vadd.f32 %v2293, 1e-08
    %v2310 = vadd.f32 %v2294, 1e-08
    %v2311 = vadd.f32 %v2295, 1e-08
    %v2312 = vadd.f32 %v2296, 1e-08
    %v2313 = vmul.f32 %v2297, %v2297
    %v2314 = vmul.f32 %v2298, %v2298
    %v2315 = vmul.f32 %v2299, %v2299
    %v2316 = vmul.f32 %v2300, %v2300
    %v2317 = vmul.f32 %v2301, %v2301
    %v2318 = vmul.f32 %v2302, %v2302
    %v2319 = vmul.f32 %v2303, %v2303
    %v2320 = vmul.f32 %v2304, %v2304
    %v2321 = vmul.f32 %v2305, %v2305
    %v2322 = vmul.f32 %v2306, %v2306
    %v2323 = vmul.f32 %v2307, %v2307
    %v2324 = vmul.f32 %v2308, %v2308
    %v2325 = vmul.f32 %v2309, %v2309
    %v2326 = vmul.f32 %v2310, %v2310
    %v2327 = vmul.f32 %v2311, %v2311
    %v2328 = vmul.f32 %v2312, %v2312
    %v2329 = vmul.f32 %v2313, 1e-08
    %v2330 = vmul.f32 %v2314, 1e-08
    %v2331 = vmul.f32 %v2315, 1e-08
    %v2332 = vmul.f32 %v2316, 1e-08
    %v2333 = vmul.f32 %v2317, 1e-08
    %v2334 = vmul.f32 %v2318, 1e-08
    %v2335 = vmul.f32 %v2319, 1e-08
    %v2336 = vmul.f32 %v2320, 1e-08
    %v2337 = vmul.f32 %v2321, 1e-08
    %v2338 = vmul.f32 %v2322, 1e-08
    %v2339 = vmul.f32 %v2323, 1e-08
    %v2340 = vmul.f32 %v2324, 1e-08
    %v2341 = vmul.f32 %v2325, 1e-08
    %v2342 = vmul.f32 %v2326, 1e-08
    %v2343 = vmul.f32 %v2327, 1e-08
    %v2344 = vmul.f32 %v2328, 1e-08
    %v2345 = vsel %vm2265, %v2313, %v2329
    %v2346 = vsel %vm2266, %v2314, %v2330
    %v2347 = vsel %vm2267, %v2315, %v2331
    %v2348 = vsel %vm2268, %v2316, %v2332
    %v2349 = vsel %vm2269, %v2317, %v2333
    %v2350 = vsel %vm2270, %v2318, %v2334
    %v2351 = vsel %vm2271, %v2319, %v2335
    %v2352 = vsel %vm2272, %v2320, %v2336
    %v2353 = vsel %vm2273, %v2321, %v2337
    %v2354 = vsel %vm2274, %v2322, %v2338
    %v2355 = vsel %vm2275, %v2323, %v2339
    %v2356 = vsel %vm2276, %v2324, %v2340
    %v2357 = vsel %vm2277, %v2325, %v2341
    %v2358 = vsel %vm2278, %v2326, %v2342
    %v2359 = vsel %vm2279, %v2327, %v2343
    %v2360 = vsel %vm2280, %v2328, %v2344
    %v2361 = vadd.f32 %v2345, %v2346
    %v2362 = vadd.f32 %v2361, %v2347
    %v2363 = vadd.f32 %v2362, %v2348
    %v2364 = vadd.f32 %v2363, %v2349
    %v2365 = vadd.f32 %v2364, %v2350
    %v2366 = vadd.f32 %v2365, %v2351
    %v2367 = vadd.f32 %v2366, %v2352
    %v2368 = vadd.f32 %v2367, %v2353
    %v2369 = vadd.f32 %v2368, %v2354
    %v2370 = vadd.f32 %v2369, %v2355
    %v2371 = vadd.f32 %v2370, %v2356
    %v2372 = vadd.f32 %v2371, %v2357
    %v2373 = vadd.f32 %v2372, %v2358
    %v2374 = vadd.f32 %v2373, %v2359
    %v2375 = vadd.f32 %v2374, %v2360
    %v2376 = vrot.slane %v2375, 4
    %v2377 = vadd.f32 %v2375, %v2376
    %v2378 = vrot.slane %v2377, 2
    %v2379 = vadd.f32 %v2377, %v2378
    %v2380 = vrot.slane %v2379, 1
    %v2381 = vadd.f32 %v2379, %v2380
    %v2382 = vadd.f32 %v2381, 1e-08
    %v2383 = vrsqrt.pop %v2382
    %v2384 = vmul.f32 %v2382, %v2383
    %vm2385 = vcmp.eq.f32.partialorder %v2382, inf
    %v2386 = vsel %vm2385, %v2382, %v2384
    %vm2387 = vcmp.eq.f32.partialorder %v2382, 0.0
    %v2388 = vand.u32 %v2382, 2147483648
    %v2389 = vsel %vm2387, %v2388, %v2386
    %2390 = vst [vmem:[#allocation7] sm:$0x1] %v2389
    // Predicated region
    $region18: #{tpu_custom_call.1} parent=1 // pred_check
      _
    $region19: #{tpu_custom_call.1} parent=1 // pred_check_branch
      %2392 = sbr.rel (0) target = $region21
    $region20: #{tpu_custom_call.1} parent=1 // pred_region
      %s2394 = ssub.s32 16, 16
      %2395 = vsyncadd [#allocation4], %s2394
      %s2397 = sshll.u32 [#allocation7], 4
      %s2398 = int_to_ptr.vmem [resolvable:$true] %s2397
      %2400 = dma.vmem_to_hbm [thread:$0]  %s2398, 16, %s2, [#allocation4]
    $region21: #{tpu_custom_call.1} parent=1 // pred_fallthru
      _
    // Predicated region
    $region22: #{tpu_custom_call.1} parent=1 // pred_check
      _
    $region23: #{tpu_custom_call.1} parent=1 // pred_check_branch
      %2402 = sbr.rel (0) target = $region25
    $region24: #{tpu_custom_call.1} parent=1 // pred_region
      %2403 = dma.done [#allocation4], 16
    $region25: #{tpu_custom_call.1} parent=1 // pred_fallthru
      _
    %2404 = vsyncpa [#allocation3], 1
    %2405 = vsyncpa [#allocation6], 1
    %2406 = vsyncpa [#allocation4], 1

</llo_original>
